<compile_context>
chip_gen: v6e
topology: v6e:2x2x1
jax: 0.10.0
libtpu: 0.0.40
codegen_flags: <defaults>
</compile_context>

<pallas_src>
import functools
import math

import numpy as np
import jax
import jax.numpy as jnp
from jax import lax
from jax.experimental import pallas as pl
from jax.experimental.pallas import tpu as pltpu

# ---------------- configuration (small, TPU-aligned shapes) ----------------
BATCH    = 2      # N
SEQ_CH   = 4      # seq_channels (C)
SEQ_LEN  = 128    # seq_length   (L)  -- lane-dense output width
D_MODEL  = 128    # d_model
D_MLP    = 256    # d_mlp
N_LAYERS = 3      # n_layers (PyTorch default)

# Lane-dense / MXU-width assumptions the kernel relies on (per review: assert, don't assume).
assert SEQ_LEN % 128 == 0 and D_MODEL % 128 == 0 and D_MLP % 128 == 0
assert D_MODEL % 2 == 0


# ---------------- SinusoidalPosEmb reference formula (used by the pure-JAX ref only) --------
def sinusoidal_pos_emb(t, dim):
    half = dim // 2
    freqs = jnp.exp(jnp.arange(half, dtype=jnp.float32) * (-math.log(10000.0) / (half - 1)))
    args = t.astype(jnp.float32)[:, None] * freqs[None, :]
    return jnp.concatenate([jnp.sin(args), jnp.cos(args)], axis=-1)   # (N, dim)


# ---------------- fused forward kernel ----------------
def _backbone_kernel(x_ref, t_ref, w_emb_ref, b_emb_ref, w1_ref, b1_ref,
                     w2_ref, b2_ref, w_un_ref, b_un_ref, o_ref, *, n_layers, half):
    # embedder: (R, L) bf16 @ (L, D) bf16 -> f32 accumulation (MXU)
    h = jnp.dot(x_ref[...], w_emb_ref[...], preferred_element_type=jnp.float32)

    # Sinusoidal timestep embedding computed in-kernel (exp/sin/cos land on the idle EUP slot).
    # pe[:, l] = sin(t * f(l))        for l <  half
    #          = cos(t * f(l-half))   for l >= half,   f(i) = exp(-ln(1e4) * i / (half-1))
    d = 2 * half
    lane = lax.broadcasted_iota(jnp.int32, (1, d), 1)                       # (1, D)
    is_sin = lane < half
    idx = jnp.where(is_sin, lane, lane - half).astype(jnp.float32)
    freqs = jnp.exp(idx * (-math.log(10000.0) / (half - 1)))                # (1, D)
    args = t_ref[...] * freqs                                               # (R,1)*(1,D) -> (R,D)
    pe = jnp.where(is_sin, jnp.sin(args), jnp.cos(args))                    # (R, D) f32

    h = h + b_emb_ref[...] + pe                                             # bias + timestep emb

    # residual MLP stack (Dropout == identity at inference); static unrolled loop
    for i in range(n_layers):
        z = jnp.dot(h.astype(jnp.bfloat16), w1_ref[i],
                    preferred_element_type=jnp.float32) + b1_ref[i]
        z = jnp.maximum(z, 0.0)                                             # ReLU
        z = jnp.dot(z.astype(jnp.bfloat16), w2_ref[i],
                    preferred_element_type=jnp.float32) + b2_ref[i]
        h = h + z

    # unembedder: (R, D) -> (R, L), lane-dense store
    o_ref[...] = jnp.dot(h.astype(jnp.bfloat16), w_un_ref[...],
                         preferred_element_type=jnp.float32) + b_un_ref[...]


@jax.jit
def mlp_backbone_forward(params, x, t):
    """x: (N, L, C) f32, t: (N,) f32 -> (N, L, C) f32."""
    N, L, C = x.shape
    R = N * C
    # x.permute(0, 2, 1) and flatten batch*channel BATCH-MAJOR (row r = b*C + c) into matmul rows.
    x_rows = jnp.transpose(x, (0, 2, 1)).reshape(R, L).astype(jnp.bfloat16)
    # Per-row timestep column, same batch-major order (t[r // C]); fused under the jit.
    t_rows = jnp.repeat(t.astype(jnp.float32), C).reshape(R, 1)

    operands = (x_rows, t_rows,
                params["w_emb"], params["b_emb"],
                params["w1"], params["b1"], params["w2"], params["b2"],
                params["w_un"], params["b_un"])

    flops = 2 * R * (L * D_MODEL + N_LAYERS * 2 * D_MODEL * D_MLP + D_MODEL * L)
    bytes_accessed = sum(a.size * a.dtype.itemsize for a in operands) + R * L * 4
    cost = pl.CostEstimate(flops=flops,
                           transcendentals=2 * R * D_MODEL,   # exp + sin/cos of the pos-emb
                           bytes_accessed=bytes_accessed)

    # Ungridded call: whole arrays VMEM-resident, no 1-step pipeline bookkeeping.
    vmem = pl.BlockSpec(memory_space=pltpu.MemorySpace.VMEM)
    out = pl.pallas_call(
        functools.partial(_backbone_kernel, n_layers=N_LAYERS, half=D_MODEL // 2),
        out_shape=jax.ShapeDtypeStruct((R, L), jnp.float32),
        in_specs=[vmem] * len(operands),
        out_specs=vmem,
        cost_estimate=cost,
    )(*operands)

    # (R, L) -> (N, C, L) -> permute(0, 2, 1) -> (N, L, C); lane-dim-4 transposes stay outside
    # the kernel (in-kernel C=4 store would be a masked vst disaster) and fuse under the jit.
    return jnp.transpose(out.reshape(N, C, L), (0, 2, 1))


# ---------------- parameters ----------------
def make_params(key):
    ks = jax.random.split(key, 8)

    def nrm(k, shape, std=0.02):
        return jax.random.normal(k, shape, jnp.float32) * std

    params = {
        "w_emb": nrm(ks[0], (SEQ_LEN, D_MODEL)),
        "b_emb": nrm(ks[1], (1, D_MODEL), 0.01),
        "w1":    nrm(ks[2], (N_LAYERS, D_MODEL, D_MLP)),
        "b1":    nrm(ks[3], (N_LAYERS, 1, D_MLP), 0.01),
        "w2":    nrm(ks[4], (N_LAYERS, D_MLP, D_MODEL)),
        "b2":    nrm(ks[5], (N_LAYERS, 1, D_MODEL), 0.01),
        "w_un":  nrm(ks[6], (D_MODEL, SEQ_LEN)),
        "b_un":  nrm(ks[7], (1, SEQ_LEN), 0.01),
    }
    # bf16 weights (MXU-native operands); biases stay f32 (added after f32 accumulation).
    for name in ("w_emb", "w1", "w2", "w_un"):
        params[name] = params[name].astype(jnp.bfloat16)
    return params


# ---------------- pure-JAX reference (same bf16 operand boundaries) ----------------
def mlp_backbone_ref(params, x, t):
    N, L, C = x.shape
    xb = jnp.transpose(x, (0, 2, 1)).reshape(N * C, L).astype(jnp.bfloat16)
    h = jnp.dot(xb, params["w_emb"], preferred_element_type=jnp.float32)
    h = h + params["b_emb"] + jnp.repeat(sinusoidal_pos_emb(t, D_MODEL), C, axis=0)
    for i in range(N_LAYERS):
        z = jnp.dot(h.astype(jnp.bfloat16), params["w1"][i],
                    preferred_element_type=jnp.float32) + params["b1"][i]
        z = jnp.maximum(z, 0.0)
        z = jnp.dot(z.astype(jnp.bfloat16), params["w2"][i],
                    preferred_element_type=jnp.float32) + params["b2"][i]
        h = h + z
    out = jnp.dot(h.astype(jnp.bfloat16), params["w_un"],
                  preferred_element_type=jnp.float32) + params["b_un"]
    return jnp.transpose(out.reshape(N, C, L), (0, 2, 1))


# ---------------- main ----------------
if __name__ == "__main__":
    key = jax.random.PRNGKey(0)
    kp, kx, kt = jax.random.split(key, 3)
    params = make_params(kp)

    x = jax.random.normal(kx, (BATCH, SEQ_LEN, SEQ_CH), jnp.float32)
    t = jax.random.uniform(kt, (BATCH,), jnp.float32, 0.0, 1000.0)

    out = jax.block_until_ready(mlp_backbone_forward(params, x, t))
    ref = jax.block_until_ready(mlp_backbone_ref(params, x, t))

    assert out.shape == (BATCH, SEQ_LEN, SEQ_CH), out.shape
    assert bool(jnp.all(jnp.isfinite(out)))
    # Slightly looser than before: the pos-emb sin/cos now runs in-kernel (Mosaic EUP) instead
    # of being shared data with the reference; bf16 operand rounding dominates anyway.
    np.testing.assert_allclose(np.asarray(out), np.asarray(ref), rtol=2e-2, atol=5e-3)
    print("KERNEL_OK")
</pallas_src>

<mosaic_0001>
module attributes {stable_mosaic.version = 11 : i64} {
  func.func @_backbone_kernel(%arg0: memref<8x128xbf16, #tpu.memory_space<vmem>>, %arg1: memref<8x1xf32, #tpu.memory_space<vmem>>, %arg2: memref<128x128xbf16, #tpu.memory_space<vmem>>, %arg3: memref<1x128xf32, #tpu.memory_space<vmem>>, %arg4: memref<3x128x256xbf16, #tpu.memory_space<vmem>>, %arg5: memref<3x1x256xf32, #tpu.memory_space<vmem>>, %arg6: memref<3x256x128xbf16, #tpu.memory_space<vmem>>, %arg7: memref<3x1x128xf32, #tpu.memory_space<vmem>>, %arg8: memref<128x128xbf16, #tpu.memory_space<vmem>>, %arg9: memref<1x128xf32, #tpu.memory_space<vmem>>, %arg10: memref<8x128xf32, #tpu.memory_space<vmem>>) attributes {dimension_semantics = [], scalar_prefetch = 0 : i64, scratch_operands = 0 : i64, tpu.core_type = #tpu.core_type<tc>} {
    %c0 = arith.constant 0 : index
    %c0_0 = arith.constant 0 : index
    %0 = vector.load %arg0[%c0, %c0_0] : memref<8x128xbf16, #tpu.memory_space<vmem>>, vector<8x128xbf16>
    %c0_1 = arith.constant 0 : index
    %c0_2 = arith.constant 0 : index
    %1 = vector.load %arg2[%c0_1, %c0_2] : memref<128x128xbf16, #tpu.memory_space<vmem>>, vector<128x128xbf16>
    %cst = arith.constant dense<0.000000e+00> : vector<8x128xf32>
    %2 = tpu.matmul %0, %1, %cst {dimension_numbers = #tpu.dot_dimension_numbers<[1], [0], [0], [1], [0, 0, 1, 1], [], []>} : vector<8x128xbf16>, vector<128x128xbf16>, vector<8x128xf32> -> vector<8x128xf32>
    %3 = tpu.iota {dimensions = array<i32: 1>} : vector<1x128xi32>
    %c64_i32 = arith.constant 64 : i32
    %4 = vector.broadcast %c64_i32 : i32 to vector<1x128xi32>
    %5 = arith.cmpi slt, %3, %4 : vector<1x128xi32>
    %c64_i32_3 = arith.constant 64 : i32
    %6 = vector.broadcast %c64_i32_3 : i32 to vector<1x128xi32>
    %7 = arith.subi %3, %6 : vector<1x128xi32>
    %8 = arith.select %5, %3, %7 : vector<1x128xi1>, vector<1x128xi32>
    %9 = arith.sitofp %8 : vector<1x128xi32> to vector<1x128xf32>
    %cst_4 = arith.constant -0.146195874 : f32
    %10 = vector.broadcast %cst_4 : f32 to vector<1x128xf32>
    %11 = arith.mulf %9, %10 : vector<1x128xf32>
    %12 = math.exp %11 : vector<1x128xf32>
    %c0_5 = arith.constant 0 : index
    %c0_6 = arith.constant 0 : index
    %13 = vector.load %arg1[%c0_5, %c0_6] : memref<8x1xf32, #tpu.memory_space<vmem>>, vector<8x1xf32>
    %14 = vector.broadcast %13 : vector<8x1xf32> to vector<8x128xf32>
    %15 = vector.broadcast %12 : vector<1x128xf32> to vector<8x128xf32>
    %16 = arith.mulf %14, %15 : vector<8x128xf32>
    %17 = math.sin %16 : vector<8x128xf32>
    %18 = math.cos %16 : vector<8x128xf32>
    %19 = vector.shape_cast %5 : vector<1x128xi1> to vector<1x128xi1>
    %20 = vector.broadcast %19 : vector<1x128xi1> to vector<8x128xi1>
    %21 = arith.select %20, %17, %18 : vector<8x128xi1>, vector<8x128xf32>
    %c0_7 = arith.constant 0 : index
    %c0_8 = arith.constant 0 : index
    %22 = vector.load %arg3[%c0_7, %c0_8] : memref<1x128xf32, #tpu.memory_space<vmem>>, vector<1x128xf32>
    %23 = vector.broadcast %22 : vector<1x128xf32> to vector<8x128xf32>
    %24 = arith.addf %2, %23 : vector<8x128xf32>
    %25 = arith.addf %24, %21 : vector<8x128xf32>
    %26 = arith.truncf %25 : vector<8x128xf32> to vector<8x128xbf16>
    %c0_9 = arith.constant 0 : index
    %c0_10 = arith.constant 0 : index
    %c0_11 = arith.constant 0 : index
    %27 = vector.load %arg4[%c0_9, %c0_10, %c0_11] : memref<3x128x256xbf16, #tpu.memory_space<vmem>>, vector<1x128x256xbf16>
    %28 = vector.shape_cast %27 : vector<1x128x256xbf16> to vector<128x256xbf16>
    %cst_12 = arith.constant dense<0.000000e+00> : vector<8x256xf32>
    %29 = tpu.matmul %26, %28, %cst_12 {dimension_numbers = #tpu.dot_dimension_numbers<[1], [0], [0], [1], [0, 0, 1, 1], [], []>} : vector<8x128xbf16>, vector<128x256xbf16>, vector<8x256xf32> -> vector<8x256xf32>
    %c0_13 = arith.constant 0 : index
    %c0_14 = arith.constant 0 : index
    %c0_15 = arith.constant 0 : index
    %30 = vector.load %arg5[%c0_13, %c0_14, %c0_15] : memref<3x1x256xf32, #tpu.memory_space<vmem>>, vector<1x1x256xf32>
    %31 = vector.shape_cast %30 : vector<1x1x256xf32> to vector<1x256xf32>
    %32 = vector.broadcast %31 : vector<1x256xf32> to vector<8x256xf32>
    %33 = arith.addf %29, %32 : vector<8x256xf32>
    %cst_16 = arith.constant 0.000000e+00 : f32
    %34 = vector.broadcast %cst_16 : f32 to vector<8x256xf32>
    %35 = arith.maximumf %33, %34 : vector<8x256xf32>
    %36 = arith.truncf %35 : vector<8x256xf32> to vector<8x256xbf16>
    %c0_17 = arith.constant 0 : index
    %c0_18 = arith.constant 0 : index
    %c0_19 = arith.constant 0 : index
    %37 = vector.load %arg6[%c0_17, %c0_18, %c0_19] : memref<3x256x128xbf16, #tpu.memory_space<vmem>>, vector<1x256x128xbf16>
    %38 = vector.shape_cast %37 : vector<1x256x128xbf16> to vector<256x128xbf16>
    %cst_20 = arith.constant dense<0.000000e+00> : vector<8x128xf32>
    %39 = tpu.matmul %36, %38, %cst_20 {dimension_numbers = #tpu.dot_dimension_numbers<[1], [0], [0], [1], [0, 0, 1, 1], [], []>} : vector<8x256xbf16>, vector<256x128xbf16>, vector<8x128xf32> -> vector<8x128xf32>
    %c0_21 = arith.constant 0 : index
    %c0_22 = arith.constant 0 : index
    %c0_23 = arith.constant 0 : index
    %40 = vector.load %arg7[%c0_21, %c0_22, %c0_23] : memref<3x1x128xf32, #tpu.memory_space<vmem>>, vector<1x1x128xf32>
    %41 = vector.shape_cast %40 : vector<1x1x128xf32> to vector<1x128xf32>
    %42 = vector.broadcast %41 : vector<1x128xf32> to vector<8x128xf32>
    %43 = arith.addf %39, %42 : vector<8x128xf32>
    %44 = arith.addf %25, %43 : vector<8x128xf32>
    %45 = arith.truncf %44 : vector<8x128xf32> to vector<8x128xbf16>
    %c1 = arith.constant 1 : index
    %c0_24 = arith.constant 0 : index
    %c0_25 = arith.constant 0 : index
    %46 = vector.load %arg4[%c1, %c0_24, %c0_25] : memref<3x128x256xbf16, #tpu.memory_space<vmem>>, vector<1x128x256xbf16>
    %47 = vector.shape_cast %46 : vector<1x128x256xbf16> to vector<128x256xbf16>
    %cst_26 = arith.constant dense<0.000000e+00> : vector<8x256xf32>
    %48 = tpu.matmul %45, %47, %cst_26 {dimension_numbers = #tpu.dot_dimension_numbers<[1], [0], [0], [1], [0, 0, 1, 1], [], []>} : vector<8x128xbf16>, vector<128x256xbf16>, vector<8x256xf32> -> vector<8x256xf32>
    %c1_27 = arith.constant 1 : index
    %c0_28 = arith.constant 0 : index
    %c0_29 = arith.constant 0 : index
    %49 = vector.load %arg5[%c1_27, %c0_28, %c0_29] : memref<3x1x256xf32, #tpu.memory_space<vmem>>, vector<1x1x256xf32>
    %50 = vector.shape_cast %49 : vector<1x1x256xf32> to vector<1x256xf32>
    %51 = vector.broadcast %50 : vector<1x256xf32> to vector<8x256xf32>
    %52 = arith.addf %48, %51 : vector<8x256xf32>
    %cst_30 = arith.constant 0.000000e+00 : f32
    %53 = vector.broadcast %cst_30 : f32 to vector<8x256xf32>
    %54 = arith.maximumf %52, %53 : vector<8x256xf32>
    %55 = arith.truncf %54 : vector<8x256xf32> to vector<8x256xbf16>
    %c1_31 = arith.constant 1 : index
    %c0_32 = arith.constant 0 : index
    %c0_33 = arith.constant 0 : index
    %56 = vector.load %arg6[%c1_31, %c0_32, %c0_33] : memref<3x256x128xbf16, #tpu.memory_space<vmem>>, vector<1x256x128xbf16>
    %57 = vector.shape_cast %56 : vector<1x256x128xbf16> to vector<256x128xbf16>
    %cst_34 = arith.constant dense<0.000000e+00> : vector<8x128xf32>
    %58 = tpu.matmul %55, %57, %cst_34 {dimension_numbers = #tpu.dot_dimension_numbers<[1], [0], [0], [1], [0, 0, 1, 1], [], []>} : vector<8x256xbf16>, vector<256x128xbf16>, vector<8x128xf32> -> vector<8x128xf32>
    %c1_35 = arith.constant 1 : index
    %c0_36 = arith.constant 0 : index
    %c0_37 = arith.constant 0 : index
    %59 = vector.load %arg7[%c1_35, %c0_36, %c0_37] : memref<3x1x128xf32, #tpu.memory_space<vmem>>, vector<1x1x128xf32>
    %60 = vector.shape_cast %59 : vector<1x1x128xf32> to vector<1x128xf32>
    %61 = vector.broadcast %60 : vector<1x128xf32> to vector<8x128xf32>
    %62 = arith.addf %58, %61 : vector<8x128xf32>
    %63 = arith.addf %44, %62 : vector<8x128xf32>
    %64 = arith.truncf %63 : vector<8x128xf32> to vector<8x128xbf16>
    %c2 = arith.constant 2 : index
    %c0_38 = arith.constant 0 : index
    %c0_39 = arith.constant 0 : index
    %65 = vector.load %arg4[%c2, %c0_38, %c0_39] : memref<3x128x256xbf16, #tpu.memory_space<vmem>>, vector<1x128x256xbf16>
    %66 = vector.shape_cast %65 : vector<1x128x256xbf16> to vector<128x256xbf16>
    %cst_40 = arith.constant dense<0.000000e+00> : vector<8x256xf32>
    %67 = tpu.matmul %64, %66, %cst_40 {dimension_numbers = #tpu.dot_dimension_numbers<[1], [0], [0], [1], [0, 0, 1, 1], [], []>} : vector<8x128xbf16>, vector<128x256xbf16>, vector<8x256xf32> -> vector<8x256xf32>
    %c2_41 = arith.constant 2 : index
    %c0_42 = arith.constant 0 : index
    %c0_43 = arith.constant 0 : index
    %68 = vector.load %arg5[%c2_41, %c0_42, %c0_43] : memref<3x1x256xf32, #tpu.memory_space<vmem>>, vector<1x1x256xf32>
    %69 = vector.shape_cast %68 : vector<1x1x256xf32> to vector<1x256xf32>
    %70 = vector.broadcast %69 : vector<1x256xf32> to vector<8x256xf32>
    %71 = arith.addf %67, %70 : vector<8x256xf32>
    %cst_44 = arith.constant 0.000000e+00 : f32
    %72 = vector.broadcast %cst_44 : f32 to vector<8x256xf32>
    %73 = arith.maximumf %71, %72 : vector<8x256xf32>
    %74 = arith.truncf %73 : vector<8x256xf32> to vector<8x256xbf16>
    %c2_45 = arith.constant 2 : index
    %c0_46 = arith.constant 0 : index
    %c0_47 = arith.constant 0 : index
    %75 = vector.load %arg6[%c2_45, %c0_46, %c0_47] : memref<3x256x128xbf16, #tpu.memory_space<vmem>>, vector<1x256x128xbf16>
    %76 = vector.shape_cast %75 : vector<1x256x128xbf16> to vector<256x128xbf16>
    %cst_48 = arith.constant dense<0.000000e+00> : vector<8x128xf32>
    %77 = tpu.matmul %74, %76, %cst_48 {dimension_numbers = #tpu.dot_dimension_numbers<[1], [0], [0], [1], [0, 0, 1, 1], [], []>} : vector<8x256xbf16>, vector<256x128xbf16>, vector<8x128xf32> -> vector<8x128xf32>
    %c2_49 = arith.constant 2 : index
    %c0_50 = arith.constant 0 : index
    %c0_51 = arith.constant 0 : index
    %78 = vector.load %arg7[%c2_49, %c0_50, %c0_51] : memref<3x1x128xf32, #tpu.memory_space<vmem>>, vector<1x1x128xf32>
    %79 = vector.shape_cast %78 : vector<1x1x128xf32> to vector<1x128xf32>
    %80 = vector.broadcast %79 : vector<1x128xf32> to vector<8x128xf32>
    %81 = arith.addf %77, %80 : vector<8x128xf32>
    %82 = arith.addf %63, %81 : vector<8x128xf32>
    %83 = arith.truncf %82 : vector<8x128xf32> to vector<8x128xbf16>
    %c0_52 = arith.constant 0 : index
    %c0_53 = arith.constant 0 : index
    %84 = vector.load %arg8[%c0_52, %c0_53] : memref<128x128xbf16, #tpu.memory_space<vmem>>, vector<128x128xbf16>
    %cst_54 = arith.constant dense<0.000000e+00> : vector<8x128xf32>
    %85 = tpu.matmul %83, %84, %cst_54 {dimension_numbers = #tpu.dot_dimension_numbers<[1], [0], [0], [1], [0, 0, 1, 1], [], []>} : vector<8x128xbf16>, vector<128x128xbf16>, vector<8x128xf32> -> vector<8x128xf32>
    %c0_55 = arith.constant 0 : index
    %c0_56 = arith.constant 0 : index
    %86 = vector.load %arg9[%c0_55, %c0_56] : memref<1x128xf32, #tpu.memory_space<vmem>>, vector<1x128xf32>
    %87 = vector.broadcast %86 : vector<1x128xf32> to vector<8x128xf32>
    %88 = arith.addf %85, %87 : vector<8x128xf32>
    %c0_57 = arith.constant 0 : index
    %c0_58 = arith.constant 0 : index
    %89 = vector.load %arg10[%c0_57, %c0_58] : memref<8x128xf32, #tpu.memory_space<vmem>>, vector<8x128xf32>
    tpu.vector_store %arg10[%c0_57, %c0_58], %88 {strides = array<i32>} : memref<8x128xf32, #tpu.memory_space<vmem>>, vector<8x128xf32>,
    return
  }
}

</mosaic_0001>

<llo_original>
// kernel: mlp_backbone_forward.1
$region0: #{mlp_backbone_forward.1}
  #allocation0 [shape = 'u32[]', space=smem, size = 0x4, offset = 0x4, fixed_abs, tag = 'smem constant byte address 0x4 - core index']
  #allocation1 [shape = 'u32[144,128]{1,0:T(1,128)}', space=vmem, size = 0x12000, scoped, tag = 'internal scratch']
  %s0 = inlined_call_operand.vmem [shape: bf16[8,128], index: 0, kind: input, shape index: {}]
  %s1 = inlined_call_operand.vmem [shape: f32[8,1], index: 1, kind: input, shape index: {}]
  %s2 = inlined_call_operand.hbm [shape: bf16[128,128], index: 2, kind: input, shape index: {}]
  %s3 = inlined_call_operand.vmem [shape: f32[1,128], index: 3, kind: input, shape index: {}]
  %s4 = inlined_call_operand.hbm [shape: bf16[3,128,256], index: 4, kind: input, shape index: {}]
  %s5 = inlined_call_operand.vmem [shape: f32[3,1,256], index: 5, kind: input, shape index: {}]
  %s6 = inlined_call_operand.hbm [shape: bf16[3,256,128], index: 6, kind: input, shape index: {}]
  %s7 = inlined_call_operand.vmem [shape: f32[3,1,128], index: 7, kind: input, shape index: {}]
  %s8 = inlined_call_operand.hbm [shape: bf16[128,128], index: 8, kind: input, shape index: {}]
  %s9 = inlined_call_operand.vmem [shape: f32[1,128], index: 9, kind: input, shape index: {}]
  %s10 = inlined_call_operand.hbm [shape: f32[8,128], index: 10, kind: output, shape index: {}]
  %s11 = sld [smem:[#allocation0]]
  $region66: #{mlp_backbone_forward.1} parent=0
    _
  %s13 = ssub.s32 1, %s11
  %s14 = scalar_select 0, %s13, %s11
  $region1: #{mlp_backbone_forward.1} parent=0
    #allocation2 [shape = 'u8[32768]{0}', space=vmem, size = 0x8000, scoped, tag = 'input window, operand 2, single buffered']
    #allocation3 [shape = 's32[1]{0}', space=sflag, size = 0x4, scoped, tag = 'scoped memory for mlp_backbone_forward.1']
    #allocation4 [shape = 's32[1]{0}', space=sflag, size = 0x4, scoped, tag = 'scoped memory for mlp_backbone_forward.1']
    #allocation5 [shape = 'u8[196608]{0}', space=vmem, size = 0x30000, scoped, tag = 'input window, operand 4, single buffered']
    #allocation6 [shape = 's32[1]{0}', space=sflag, size = 0x4, scoped, tag = 'scoped memory for mlp_backbone_forward.1']
    #allocation7 [shape = 'u8[196608]{0}', space=vmem, size = 0x30000, scoped, tag = 'input window, operand 6, single buffered']
    #allocation8 [shape = 'u8[32768]{0}', space=vmem, size = 0x8000, scoped, tag = 'input window, operand 8, single buffered']
    #allocation9 [shape = 's32[1]{0}', space=sflag, size = 0x4, scoped, tag = 'scoped memory for mlp_backbone_forward.1']
    #allocation10 [shape = 'u8[4096]{0}', space=vmem, size = 0x1000, scoped, tag = 'output window, operand 0, single buffered']
    %15 = vsyncpa [#allocation3], 0
    %16 = vsyncpa [#allocation6], 0
    %17 = vsyncpa [#allocation9], 0
    %18 = vsyncpa [#allocation4], 0
    // Predicated region
    $region2: #{mlp_backbone_forward.1} parent=1 // pred_check
      _
    $region3: #{mlp_backbone_forward.1} parent=1 // pred_check_branch
      %20 = sbr.rel (0) target = $region5
    $region4: #{mlp_backbone_forward.1} parent=1 // pred_region
      _
    $region5: #{mlp_backbone_forward.1} parent=1 // pred_fallthru
      _
    // Predicated region
    $region6: #{mlp_backbone_forward.1} parent=1 // pred_check
      _
    $region7: #{mlp_backbone_forward.1} parent=1 // pred_check_branch
      %22 = sbr.rel (0) target = $region9
    $region8: #{mlp_backbone_forward.1} parent=1 // pred_region
      _
    $region9: #{mlp_backbone_forward.1} parent=1 // pred_fallthru
      _
    // Predicated region
    $region10: #{mlp_backbone_forward.1} parent=1 // pred_check
      _
    $region11: #{mlp_backbone_forward.1} parent=1 // pred_check_branch
      %24 = sbr.rel (0) target = $region13
    $region12: #{mlp_backbone_forward.1} parent=1 // pred_region
      %s26 = ssub.s32 1024, 1024
      %27 = vsyncadd [#allocation3], %s26
      %s28 = sshll.u32 [#allocation2], 4
      %s29 = int_to_ptr.vmem [resolvable:$true] %s28
      %34 = dma.hbm_to_vmem [thread:$0]  %s2, 1024, %s29, [#allocation3], 64, 64, 4
    $region13: #{mlp_backbone_forward.1} parent=1 // pred_fallthru
      _
    // Predicated region
    $region14: #{mlp_backbone_forward.1} parent=1 // pred_check
      _
    $region15: #{mlp_backbone_forward.1} parent=1 // pred_check_branch
      %36 = sbr.rel (0) target = $region17
    $region16: #{mlp_backbone_forward.1} parent=1 // pred_region
      _
    $region17: #{mlp_backbone_forward.1} parent=1 // pred_fallthru
      _
    // Predicated region
    $region18: #{mlp_backbone_forward.1} parent=1 // pred_check
      _
    $region19: #{mlp_backbone_forward.1} parent=1 // pred_check_branch
      %38 = sbr.rel (0) target = $region21
    $region20: #{mlp_backbone_forward.1} parent=1 // pred_region
      %s40 = ssub.s32 6144, 6144
      %41 = vsyncadd [#allocation6], %s40
      %s42 = sshll.u32 [#allocation5], 4
      %s43 = int_to_ptr.vmem [resolvable:$true] %s42
      %48 = dma.hbm_to_vmem [thread:$0]  %s4, 6144, %s43, [#allocation6], 128, 128, 8
    $region21: #{mlp_backbone_forward.1} parent=1 // pred_fallthru
      _
    // Predicated region
    $region22: #{mlp_backbone_forward.1} parent=1 // pred_check
      _
    $region23: #{mlp_backbone_forward.1} parent=1 // pred_check_branch
      %50 = sbr.rel (0) target = $region25
    $region24: #{mlp_backbone_forward.1} parent=1 // pred_region
      _
    $region25: #{mlp_backbone_forward.1} parent=1 // pred_fallthru
      _
    // Predicated region
    $region26: #{mlp_backbone_forward.1} parent=1 // pred_check
      _
    $region27: #{mlp_backbone_forward.1} parent=1 // pred_check_branch
      %52 = sbr.rel (0) target = $region29
    $region28: #{mlp_backbone_forward.1} parent=1 // pred_region
      %s54 = ssub.s32 6144, 6144
      %55 = vsyncadd [#allocation6], %s54
      %s56 = sshll.u32 [#allocation7], 4
      %s57 = int_to_ptr.vmem [resolvable:$true] %s56
      %62 = dma.hbm_to_vmem [thread:$0]  %s6, 6144, %s57, [#allocation6], 64, 64, 4
    $region29: #{mlp_backbone_forward.1} parent=1 // pred_fallthru
      _
    // Predicated region
    $region30: #{mlp_backbone_forward.1} parent=1 // pred_check
      _
    $region31: #{mlp_backbone_forward.1} parent=1 // pred_check_branch
      %64 = sbr.rel (0) target = $region33
    $region32: #{mlp_backbone_forward.1} parent=1 // pred_region
      _
    $region33: #{mlp_backbone_forward.1} parent=1 // pred_fallthru
      _
    // Predicated region
    $region34: #{mlp_backbone_forward.1} parent=1 // pred_check
      _
    $region35: #{mlp_backbone_forward.1} parent=1 // pred_check_branch
      %66 = sbr.rel (0) target = $region37
    $region36: #{mlp_backbone_forward.1} parent=1 // pred_region
      %s68 = ssub.s32 1024, 1024
      %69 = vsyncadd [#allocation9], %s68
      %s70 = sshll.u32 [#allocation8], 4
      %s71 = int_to_ptr.vmem [resolvable:$true] %s70
      %76 = dma.hbm_to_vmem [thread:$0]  %s8, 1024, %s71, [#allocation9], 64, 64, 4
    $region37: #{mlp_backbone_forward.1} parent=1 // pred_fallthru
      _
    // Predicated region
    $region38: #{mlp_backbone_forward.1} parent=1 // pred_check
      _
    $region39: #{mlp_backbone_forward.1} parent=1 // pred_check_branch
      %78 = sbr.rel (0) target = $region41
    $region40: #{mlp_backbone_forward.1} parent=1 // pred_region
      _
    $region41: #{mlp_backbone_forward.1} parent=1 // pred_fallthru
      _
    // Predicated region
    $region42: #{mlp_backbone_forward.1} parent=1 // pred_check
      _
    $region43: #{mlp_backbone_forward.1} parent=1 // pred_check_branch
      %80 = sbr.rel (0) target = $region45
    $region44: #{mlp_backbone_forward.1} parent=1 // pred_region
      %81 = dma.done [#allocation3], 1024
    $region45: #{mlp_backbone_forward.1} parent=1 // pred_fallthru
      _
    // Predicated region
    $region46: #{mlp_backbone_forward.1} parent=1 // pred_check
      _
    $region47: #{mlp_backbone_forward.1} parent=1 // pred_check_branch
      %83 = sbr.rel (0) target = $region49
    $region48: #{mlp_backbone_forward.1} parent=1 // pred_region
      %84 = dma.done [#allocation6], 6144
    $region49: #{mlp_backbone_forward.1} parent=1 // pred_fallthru
      _
    // Predicated region
    $region50: #{mlp_backbone_forward.1} parent=1 // pred_check
      _
    $region51: #{mlp_backbone_forward.1} parent=1 // pred_check_branch
      %86 = sbr.rel (0) target = $region53
    $region52: #{mlp_backbone_forward.1} parent=1 // pred_region
      %87 = dma.done [#allocation6], 6144
    $region53: #{mlp_backbone_forward.1} parent=1 // pred_fallthru
      _
    // Predicated region
    $region54: #{mlp_backbone_forward.1} parent=1 // pred_check
      _
    $region55: #{mlp_backbone_forward.1} parent=1 // pred_check_branch
      %89 = sbr.rel (0) target = $region57
    $region56: #{mlp_backbone_forward.1} parent=1 // pred_region
      %90 = dma.done [#allocation9], 1024
    $region57: #{mlp_backbone_forward.1} parent=1 // pred_fallthru
      _
    %v92 = vld [vmem:[%s0] sm:$0xf]
    %v93 = vld [vmem:[#allocation2] sm:$0xf]
    %v94 = vld [vmem:[#allocation2 + $0x4] sm:$0xf]
    %v95 = vld [vmem:[#allocation2 + $0x8] sm:$0xf]
    %v96 = vld [vmem:[#allocation2 + $0xc] sm:$0xf]
    %v97 = vld [vmem:[#allocation2 + $0x10] sm:$0xf]
    %v98 = vld [vmem:[#allocation2 + $0x14] sm:$0xf]
    %v99 = vld [vmem:[#allocation2 + $0x18] sm:$0xf]
    %v100 = vld [vmem:[#allocation2 + $0x1c] sm:$0xf]
    %v101 = vld [vmem:[#allocation2 + $0x20] sm:$0xf]
    %v102 = vld [vmem:[#allocation2 + $0x24] sm:$0xf]
    %v103 = vld [vmem:[#allocation2 + $0x28] sm:$0xf]
    %v104 = vld [vmem:[#allocation2 + $0x2c] sm:$0xf]
    %v105 = vld [vmem:[#allocation2 + $0x30] sm:$0xf]
    %v106 = vld [vmem:[#allocation2 + $0x34] sm:$0xf]
    %v107 = vld [vmem:[#allocation2 + $0x38] sm:$0xf]
    %v108 = vld [vmem:[#allocation2 + $0x3c] sm:$0xf]
    %v109 = vlaneseq
    %v110 = vand.u32 %v109, 127
    %vm111 = vcmp.lt.s32.totalorder %v110, 64
    %v112 = vsub.s32 %v110, 64
    %v113 = vsel %vm111, %v110, %v112
    %v114 = vcvt.s32.f32 %v113
    %v115 = vmul.f32 %v114, -0.14619587
    %v116 = vmul.f32 %v115, 1.442695
    %v117 = vpow.pop %v116
    %v118 = vld [vmem:[%s1] sm:$0xff]
    %120 = vset.pattern.permute.xlu0 0
    %121 = vperm.xlu0 %120, %v118
    %v122 = vpop.permute.xlu0 %121
    %v124 = vmul.f32 %v122, %v117
    %v125 = vand.u32 2147483647, %v124
    %vm126 = vcmp.le.f32.partialorder %v125, 0.7853982
    %vm127 = vcmp.lt.s32.totalorder %v124, 0
    %v128 = vand.u32 %v124, 2139095040
    %v129 = vshrl.u32 %v128, 23
    %v130 = vsub.s32 %v129, 127
    %v131 = vand.u32 2147483647, %v124
    %v132 = vand.u32 %v131, 8388607
    %v133 = vor.u32 %v132, 8388608
    %v134 = vsub.s32 0, %v133
    %v135 = vadd.s32 %v130, 1
    %vm136 = vcmp.gt.s32.totalorder %v135, 0
    %v137 = vsel %vm136, %v135, 0
    %v138 = vshrl.u32 %v137, 5
    %v139 = vand.u32 %v137, 31
    %v140 = vsub.s32 32, %v139
    %v141 = vshrl.u32 683565275, %v140
    %v142 = vshll.u32 683565275, %v139
    %v143 = vshrl.u32 2475754826, %v140
    %v144 = vor.u32 %v142, %v143
    %v145 = vshll.u32 2475754826, %v139
    %v146 = vshrl.u32 2131351028, %v140
    %v147 = vor.u32 %v145, %v146
    %v148 = vshll.u32 2131351028, %v139
    %v149 = vshrl.u32 2102212464, %v140
    %v150 = vor.u32 %v148, %v149
    %v151 = vshll.u32 2102212464, %v139
    %v152 = vshrl.u32 920167782, %v140
    %v153 = vor.u32 %v151, %v152
    %v154 = vshll.u32 920167782, %v139
    %v155 = vshrl.u32 1326507024, %v140
    %v156 = vor.u32 %v154, %v155
    %vm157 = vcmp.lt.s32.totalorder %v138, 1
    %vm158 = vcmp.lt.s32.totalorder %v138, 2
    %vm159 = vcmp.lt.s32.totalorder %v138, 3
    %vm160 = vcmp.lt.s32.totalorder %v138, 4
    %v161 = vsel %vm157, %v141, %v144
    %v162 = vsel %vm160, %v150, 2102212464
    %v163 = vsel %vm159, %v147, %v162
    %v164 = vsel %vm158, %v161, %v163
    %v165 = vsel %vm157, %v144, %v147
    %v166 = vsel %vm160, %v153, 920167782
    %v167 = vsel %vm159, %v150, %v166
    %v168 = vsel %vm158, %v165, %v167
    %v169 = vsel %vm157, %v147, %v150
    %v170 = vsel %vm160, %v156, 1326507024
    %v171 = vsel %vm159, %v153, %v170
    %v172 = vsel %vm158, %v169, %v171
    %v173 = vshll.u32 %v133, 8
    %v174 = vmul.u32.u64.compose %v173, %v172
    %v175 = vextract.low.u32 %v174
    %v176 = vextract.high.u32 %v174
    %v177 = vmul.u32.u64.compose %v173, %v168
    %v178 = vextract.low.u32 %v177
    %v179 = vextract.high.u32 %v177
    %v180 = vmul.u32 %v173, %v164
    %v181 = vadd.s32 %v176, %v178
    %vm182 = vc.u32 %v176, %v178
    %v183 = vadd.s32 %v179, 1
    %v184 = vsel %vm182, %v183, %v179
    %v185 = vadd.s32 %v180, %v184
    %v186 = vadd.s32 %v185, 536870912
    %v187 = vshrl.u32 %v186, 30
    %v188 = vshll.u32 %v187, 30
    %v189 = vsub.s32 %v185, %v188
    %vm190 = vcmp.lt.s32.totalorder %v189, 0
    %v191 = vsub.s32 0, %v189
    %v192 = vsel %vm190, %v191, %v189
    %v193 = vclz %v192
    %v194 = vsub.s32 %v193, 2
    %vm195 = vcmp.gt.s32.totalorder 0, %v194
    %v196 = vsel %vm195, 0, %v194
    %v197 = vsub.s32 32, %v196
    %v198 = vshll.u32 %v189, %v196
    %v199 = vshrl.u32 %v181, %v197
    %v200 = vor.u32 %v198, %v199
    %v201 = vsub.s32 4294967266, %v196
    %v202 = vadd.s32 %v201, 127
    %v203 = vshll.u32 %v202, 23
    %v204 = vor.u32 4788187, %v203
    %v205 = vand.u32 2147483647, %v204
    %v207 = vcvt.s32.f32 %v200
    %v208 = vmul.f32 %v207, %v205
    %v209 = vxor.u32 %v208, 2147483648
    %v210 = vsel %vm127, %v209, %v208
    %v211 = vsub.s32 4, %v187
    %v212 = vsel %vm127, %v211, %v187
    %v213 = vsel %vm126, %v124, %v210
    %v214 = vsel %vm126, 0, %v212
    %v215 = vcosq.f32.pop %v213
    %v216 = vsinq.f32.pop %v213
    %vm217 = vweird.f32 %v124
    %v218 = vadd.s32 %v214, 3
    %v219 = vand.u32 %v218, 3
    %vm220 = vcmp.lt.s32.totalorder %v219, 2
    %vm221 = vcmp.eq.s32.totalorder %v219, 0
    %v222 = vxor.u32 %v216, 2147483648
    %v223 = vsel %vm221, %v215, %v222
    %vm224 = vcmp.eq.s32.totalorder %v219, 2
    %v225 = vxor.u32 %v215, 2147483648
    %v226 = vsel %vm224, %v225, %v216
    %v227 = vsel %vm220, %v223, %v226
    %v228 = vsel %vm217, nan, %v227
    %v229 = vand.u32 2147483647, %v124
    %vm230 = vcmp.le.f32.partialorder %v229, 0.7853982
    %vm231 = vcmp.lt.s32.totalorder %v124, 0
    %v232 = vand.u32 %v124, 2139095040
    %v233 = vshrl.u32 %v232, 23
    %v234 = vsub.s32 %v233, 127
    %v235 = vand.u32 2147483647, %v124
    %v236 = vand.u32 %v235, 8388607
    %v237 = vor.u32 %v236, 8388608
    %v238 = vsub.s32 0, %v237
    %v239 = vadd.s32 %v234, 1
    %vm240 = vcmp.gt.s32.totalorder %v239, 0
    %v241 = vsel %vm240, %v239, 0
    %v242 = vshrl.u32 %v241, 5
    %v243 = vand.u32 %v241, 31
    %v244 = vsub.s32 32, %v243
    %v245 = vshrl.u32 683565275, %v244
    %v246 = vshll.u32 683565275, %v243
    %v247 = vshrl.u32 2475754826, %v244
    %v248 = vor.u32 %v246, %v247
    %v249 = vshll.u32 2475754826, %v243
    %v250 = vshrl.u32 2131351028, %v244
    %v251 = vor.u32 %v249, %v250
    %v252 = vshll.u32 2131351028, %v243
    %v253 = vshrl.u32 2102212464, %v244
    %v254 = vor.u32 %v252, %v253
    %v255 = vshll.u32 2102212464, %v243
    %v256 = vshrl.u32 920167782, %v244
    %v257 = vor.u32 %v255, %v256
    %v258 = vshll.u32 920167782, %v243
    %v259 = vshrl.u32 1326507024, %v244
    %v260 = vor.u32 %v258, %v259
    %vm261 = vcmp.lt.s32.totalorder %v242, 1
    %vm262 = vcmp.lt.s32.totalorder %v242, 2
    %vm263 = vcmp.lt.s32.totalorder %v242, 3
    %vm264 = vcmp.lt.s32.totalorder %v242, 4
    %v265 = vsel %vm261, %v245, %v248
    %v266 = vsel %vm264, %v254, 2102212464
    %v267 = vsel %vm263, %v251, %v266
    %v268 = vsel %vm262, %v265, %v267
    %v269 = vsel %vm261, %v248, %v251
    %v270 = vsel %vm264, %v257, 920167782
    %v271 = vsel %vm263, %v254, %v270
    %v272 = vsel %vm262, %v269, %v271
    %v273 = vsel %vm261, %v251, %v254
    %v274 = vsel %vm264, %v260, 1326507024
    %v275 = vsel %vm263, %v257, %v274
    %v276 = vsel %vm262, %v273, %v275
    %v277 = vshll.u32 %v237, 8
    %v278 = vmul.u32.u64.compose %v277, %v276
    %v279 = vextract.low.u32 %v278
    %v280 = vextract.high.u32 %v278
    %v281 = vmul.u32.u64.compose %v277, %v272
    %v282 = vextract.low.u32 %v281
    %v283 = vextract.high.u32 %v281
    %v284 = vmul.u32 %v277, %v268
    %v285 = vadd.s32 %v280, %v282
    %vm286 = vc.u32 %v280, %v282
    %v287 = vadd.s32 %v283, 1
    %v288 = vsel %vm286, %v287, %v283
    %v289 = vadd.s32 %v284, %v288
    %v290 = vadd.s32 %v289, 536870912
    %v291 = vshrl.u32 %v290, 30
    %v292 = vshll.u32 %v291, 30
    %v293 = vsub.s32 %v289, %v292
    %vm294 = vcmp.lt.s32.totalorder %v293, 0
    %v295 = vsub.s32 0, %v293
    %v296 = vsel %vm294, %v295, %v293
    %v297 = vclz %v296
    %v298 = vsub.s32 %v297, 2
    %vm299 = vcmp.gt.s32.totalorder 0, %v298
    %v300 = vsel %vm299, 0, %v298
    %v301 = vsub.s32 32, %v300
    %v302 = vshll.u32 %v293, %v300
    %v303 = vshrl.u32 %v285, %v301
    %v304 = vor.u32 %v302, %v303
    %v305 = vsub.s32 4294967266, %v300
    %v306 = vadd.s32 %v305, 127
    %v307 = vshll.u32 %v306, 23
    %v308 = vor.u32 4788187, %v307
    %v309 = vand.u32 2147483647, %v308
    %v311 = vcvt.s32.f32 %v304
    %v312 = vmul.f32 %v311, %v309
    %v313 = vxor.u32 %v312, 2147483648
    %v314 = vsel %vm231, %v313, %v312
    %v315 = vsub.s32 4, %v291
    %v316 = vsel %vm231, %v315, %v291
    %v317 = vsel %vm230, %v124, %v314
    %v318 = vsel %vm230, 0, %v316
    %v319 = vcosq.f32.pop %v317
    %v320 = vsinq.f32.pop %v317
    %vm321 = vweird.f32 %v124
    %v322 = vand.u32 %v318, 3
    %vm323 = vcmp.lt.s32.totalorder %v322, 2
    %vm324 = vcmp.eq.s32.totalorder %v322, 0
    %v325 = vxor.u32 %v320, 2147483648
    %v326 = vsel %vm324, %v319, %v325
    %vm327 = vcmp.eq.s32.totalorder %v322, 2
    %v328 = vxor.u32 %v319, 2147483648
    %v329 = vsel %vm327, %v328, %v320
    %v330 = vsel %vm323, %v326, %v329
    %v331 = vsel %vm321, nan, %v330
    %v332 = vsel %vm111, 1, 0
    %vm333 = vcmp.eq.s32.totalorder %v332, 1
    %v334 = vsel %vm333, %v228, %v331
    %v335 = vld [vmem:[%s3] sm:$0x1]
    %v337 = vlaneseq
    %v338 = vshrl.u32 %v337, 7
    %v339 = vsub.s32 0, %v338
    %v340 = vrot.slane %v335, %v339
    %v358 = vunpack.c.l.b16 %v93
    %v359 = vunpack.c.l.b16 %v94
    %v360 = vunpack.c.l.b16 %v95
    %v361 = vunpack.c.l.b16 %v96
    %v362 = vunpack.c.l.b16 %v97
    %v363 = vunpack.c.l.b16 %v98
    %v364 = vunpack.c.l.b16 %v99
    %v365 = vunpack.c.l.b16 %v100
    %v366 = vunpack.c.l.b16 %v101
    %v367 = vunpack.c.l.b16 %v102
    %v368 = vunpack.c.l.b16 %v103
    %v369 = vunpack.c.l.b16 %v104
    %v370 = vunpack.c.l.b16 %v105
    %v371 = vunpack.c.l.b16 %v106
    %v372 = vunpack.c.l.b16 %v107
    %v373 = vunpack.c.l.b16 %v108
    %v374 = vpack.c.b16 %v359, %v358
    %v375 = vpack.c.b16 %v361, %v360
    %v376 = vpack.c.b16 %v363, %v362
    %v377 = vpack.c.b16 %v365, %v364
    %v378 = vpack.c.b16 %v367, %v366
    %v379 = vpack.c.b16 %v369, %v368
    %v380 = vpack.c.b16 %v371, %v370
    %v381 = vpack.c.b16 %v373, %v372
    %390 = vmatprep.subr.bf16.mxu0 0
    %391 = vmatpush1.bf16.msra.mxu0 %v381
    %392 = vmatprep.subr.bf16.mxu0 0
    %393 = vmatpush1.bf16.msra.mxu0 %v380
    %394 = vmatprep.subr.bf16.mxu0 0
    %395 = vmatpush1.bf16.msra.mxu0 %v379
    %396 = vmatprep.subr.bf16.mxu0 0
    %397 = vmatpush1.bf16.msra.mxu0 %v378
    %398 = vmatprep.subr.bf16.mxu0 0
    %399 = vmatpush1.bf16.msra.mxu0 %v377
    %400 = vmatprep.subr.bf16.mxu0 0
    %401 = vmatpush1.bf16.msra.mxu0 %v376
    %402 = vmatprep.subr.bf16.mxu0 0
    %403 = vmatpush1.bf16.msra.mxu0 %v375
    %404 = vmatprep.subr.bf16.mxu0 0
    %405 = vmatpush1.bf16.msra.mxu0 %v374
    %406 = vmatprep.subr.bf16.mxu0 0
    %407 = vmatpush2.bf16.msra.mxu0 0
    %408 = vmatprep.subr.bf16.mxu0 0
    %409 = vmatpush2.bf16.msra.mxu0 0
    %410 = vmatprep.subr.bf16.mxu0 0
    %411 = vmatpush2.bf16.msra.mxu0 0
    %412 = vmatprep.subr.bf16.mxu0 0
    %413 = vmatpush2.bf16.msra.mxu0 0
    %414 = vmatprep.subr.bf16.mxu0 0
    %415 = vmatpush2.bf16.msra.mxu0 0
    %416 = vmatprep.subr.bf16.mxu0 0
    %417 = vmatpush2.bf16.msra.mxu0 0
    %418 = vmatprep.subr.bf16.mxu0 0
    %419 = vmatpush2.bf16.msra.mxu0 0
    %420 = vmatprep.subr.bf16.mxu0 0
    %421 = vmatpush2.bf16.msra.mxu0 0
    %422 = vmatprep.mubr.bf16.mxu0 0
    %423 = vmatmul.mubr.bf16.gmra.mxu0 %v92
    %v424 = vpop.f32.mrf.mxu0
    %v425 = vadd.f32 %v340, %v424
    %v426 = vpop.f32.mrf.mxu0
    %v427 = vpop.f32.mrf.mxu0
    %v428 = vpop.f32.mrf.mxu0
    %429 = vdwg.mxu0
    %v430 = vadd.f32 %v425, %v334
    %v431 = vpack.c.bf16 %v430, %v430
    %v432 = vld [vmem:[#allocation5] sm:$0xff]
    %v433 = vld [vmem:[#allocation5 + $0x8] sm:$0xff]
    %v434 = vld [vmem:[#allocation5 + $0x10] sm:$0xff]
    %v435 = vld [vmem:[#allocation5 + $0x18] sm:$0xff]
    %v436 = vld [vmem:[#allocation5 + $0x20] sm:$0xff]
    %v437 = vld [vmem:[#allocation5 + $0x28] sm:$0xff]
    %v438 = vld [vmem:[#allocation5 + $0x30] sm:$0xff]
    %v439 = vld [vmem:[#allocation5 + $0x38] sm:$0xff]
    %v440 = vld [vmem:[#allocation5 + $0x40] sm:$0xff]
    %v441 = vld [vmem:[#allocation5 + $0x48] sm:$0xff]
    %v442 = vld [vmem:[#allocation5 + $0x50] sm:$0xff]
    %v443 = vld [vmem:[#allocation5 + $0x58] sm:$0xff]
    %v444 = vld [vmem:[#allocation5 + $0x60] sm:$0xff]
    %v445 = vld [vmem:[#allocation5 + $0x68] sm:$0xff]
    %v446 = vld [vmem:[#allocation5 + $0x70] sm:$0xff]
    %v447 = vld [vmem:[#allocation5 + $0x78] sm:$0xff]
    %v448 = vld [vmem:[%s5] sm:$0x3]
    %v450 = vlaneseq
    %v451 = vshrl.u32 %v450, 7
    %v452 = vsub.s32 0, %v451
    %v453 = vrot.slane %v448, %v452
    %v454 = vlaneseq
    %v455 = vshrl.u32 %v454, 7
    %v456 = vsub.s32 1, %v455
    %v457 = vrot.slane %v448, %v456
    %v476 = vunpack.c.l.b16 %v432
    %v477 = vunpack.c.h.b16 %v432
    %v478 = vunpack.c.l.b16 %v433
    %v479 = vunpack.c.h.b16 %v433
    %v480 = vunpack.c.l.b16 %v434
    %v481 = vunpack.c.h.b16 %v434
    %v482 = vunpack.c.l.b16 %v435
    %v483 = vunpack.c.h.b16 %v435
    %v484 = vunpack.c.l.b16 %v436
    %v485 = vunpack.c.h.b16 %v436
    %v486 = vunpack.c.l.b16 %v437
    %v487 = vunpack.c.h.b16 %v437
    %v488 = vunpack.c.l.b16 %v438
    %v489 = vunpack.c.h.b16 %v438
    %v490 = vunpack.c.l.b16 %v439
    %v491 = vunpack.c.h.b16 %v439
    %v492 = vunpack.c.l.b16 %v440
    %v493 = vunpack.c.h.b16 %v440
    %v494 = vunpack.c.l.b16 %v441
    %v495 = vunpack.c.h.b16 %v441
    %v496 = vunpack.c.l.b16 %v442
    %v497 = vunpack.c.h.b16 %v442
    %v498 = vunpack.c.l.b16 %v443
    %v499 = vunpack.c.h.b16 %v443
    %v500 = vunpack.c.l.b16 %v444
    %v501 = vunpack.c.h.b16 %v444
    %v502 = vunpack.c.l.b16 %v445
    %v503 = vunpack.c.h.b16 %v445
    %v504 = vunpack.c.l.b16 %v446
    %v505 = vunpack.c.h.b16 %v446
    %v506 = vunpack.c.l.b16 %v447
    %v507 = vunpack.c.h.b16 %v447
    %v508 = vpack.c.b16 %v478, %v476
    %v509 = vpack.c.b16 %v479, %v477
    %v510 = vpack.c.b16 %v482, %v480
    %v511 = vpack.c.b16 %v483, %v481
    %v512 = vpack.c.b16 %v486, %v484
    %v513 = vpack.c.b16 %v487, %v485
    %v514 = vpack.c.b16 %v490, %v488
    %v515 = vpack.c.b16 %v491, %v489
    %v516 = vpack.c.b16 %v494, %v492
    %v517 = vpack.c.b16 %v495, %v493
    %v518 = vpack.c.b16 %v498, %v496
    %v519 = vpack.c.b16 %v499, %v497
    %v520 = vpack.c.b16 %v502, %v500
    %v521 = vpack.c.b16 %v503, %v501
    %v522 = vpack.c.b16 %v506, %v504
    %v523 = vpack.c.b16 %v507, %v505
    %540 = vmatprep.subr.bf16.mxu0 %v523
    %541 = vmatpush1.bf16.msra.mxu0 %v522
    %542 = vmatprep.subr.bf16.mxu0 %v521
    %543 = vmatpush1.bf16.msra.mxu0 %v520
    %544 = vmatprep.subr.bf16.mxu0 %v519
    %545 = vmatpush1.bf16.msra.mxu0 %v518
    %546 = vmatprep.subr.bf16.mxu0 %v517
    %547 = vmatpush1.bf16.msra.mxu0 %v516
    %548 = vmatprep.subr.bf16.mxu0 %v515
    %549 = vmatpush1.bf16.msra.mxu0 %v514
    %550 = vmatprep.subr.bf16.mxu0 %v513
    %551 = vmatpush1.bf16.msra.mxu0 %v512
    %552 = vmatprep.subr.bf16.mxu0 %v511
    %553 = vmatpush1.bf16.msra.mxu0 %v510
    %554 = vmatprep.subr.bf16.mxu0 %v509
    %555 = vmatpush1.bf16.msra.mxu0 %v508
    %556 = vmatprep.subr.bf16.mxu0 0
    %557 = vmatpush2.bf16.msra.mxu0 0
    %558 = vmatprep.subr.bf16.mxu0 0
    %559 = vmatpush2.bf16.msra.mxu0 0
    %560 = vmatprep.subr.bf16.mxu0 0
    %561 = vmatpush2.bf16.msra.mxu0 0
    %562 = vmatprep.subr.bf16.mxu0 0
    %563 = vmatpush2.bf16.msra.mxu0 0
    %564 = vmatprep.subr.bf16.mxu0 0
    %565 = vmatpush2.bf16.msra.mxu0 0
    %566 = vmatprep.subr.bf16.mxu0 0
    %567 = vmatpush2.bf16.msra.mxu0 0
    %568 = vmatprep.subr.bf16.mxu0 0
    %569 = vmatpush2.bf16.msra.mxu0 0
    %570 = vmatprep.subr.bf16.mxu0 0
    %571 = vmatpush2.bf16.msra.mxu0 0
    %572 = vmatprep.mubr.bf16.mxu0 0
    %573 = vmatmul.mubr.bf16.gmra.mxu0 %v431
    %v574 = vpop.f32.mrf.mxu0
    %v575 = vadd.f32 %v453, %v574
    %v576 = vpop.f32.mrf.mxu0
    %v577 = vadd.f32 %v457, %v576
    %v578 = vpop.f32.mrf.mxu0
    %v579 = vpop.f32.mrf.mxu0
    %580 = vdwg.mxu0
    %v581 = vmax.f32 %v575, 0.0
    %v582 = vmax.f32 %v577, 0.0
    %v583 = vpack.c.bf16 %v581, %v581
    %v584 = vpack.c.bf16 %v582, %v582
    %v585 = vld [vmem:[#allocation7] sm:$0xf]
    %v586 = vld [vmem:[#allocation7 + $0x4] sm:$0xf]
    %v587 = vld [vmem:[#allocation7 + $0x8] sm:$0xf]
    %v588 = vld [vmem:[#allocation7 + $0xc] sm:$0xf]
    %v589 = vld [vmem:[#allocation7 + $0x10] sm:$0xf]
    %v590 = vld [vmem:[#allocation7 + $0x14] sm:$0xf]
    %v591 = vld [vmem:[#allocation7 + $0x18] sm:$0xf]
    %v592 = vld [vmem:[#allocation7 + $0x1c] sm:$0xf]
    %v593 = vld [vmem:[#allocation7 + $0x20] sm:$0xf]
    %v594 = vld [vmem:[#allocation7 + $0x24] sm:$0xf]
    %v595 = vld [vmem:[#allocation7 + $0x28] sm:$0xf]
    %v596 = vld [vmem:[#allocation7 + $0x2c] sm:$0xf]
    %v597 = vld [vmem:[#allocation7 + $0x30] sm:$0xf]
    %v598 = vld [vmem:[#allocation7 + $0x34] sm:$0xf]
    %v599 = vld [vmem:[#allocation7 + $0x38] sm:$0xf]
    %v600 = vld [vmem:[#allocation7 + $0x3c] sm:$0xf]
    %v601 = vld [vmem:[#allocation7 + $0x40] sm:$0xf]
    %v602 = vld [vmem:[#allocation7 + $0x44] sm:$0xf]
    %v603 = vld [vmem:[#allocation7 + $0x48] sm:$0xf]
    %v604 = vld [vmem:[#allocation7 + $0x4c] sm:$0xf]
    %v605 = vld [vmem:[#allocation7 + $0x50] sm:$0xf]
    %v606 = vld [vmem:[#allocation7 + $0x54] sm:$0xf]
    %v607 = vld [vmem:[#allocation7 + $0x58] sm:$0xf]
    %v608 = vld [vmem:[#allocation7 + $0x5c] sm:$0xf]
    %v609 = vld [vmem:[#allocation7 + $0x60] sm:$0xf]
    %v610 = vld [vmem:[#allocation7 + $0x64] sm:$0xf]
    %v611 = vld [vmem:[#allocation7 + $0x68] sm:$0xf]
    %v612 = vld [vmem:[#allocation7 + $0x6c] sm:$0xf]
    %v613 = vld [vmem:[#allocation7 + $0x70] sm:$0xf]
    %v614 = vld [vmem:[#allocation7 + $0x74] sm:$0xf]
    %v615 = vld [vmem:[#allocation7 + $0x78] sm:$0xf]
    %v616 = vld [vmem:[#allocation7 + $0x7c] sm:$0xf]
    %v617 = vld [vmem:[%s7] sm:$0x1]
    %v619 = vlaneseq
    %v620 = vshrl.u32 %v619, 7
    %v621 = vsub.s32 0, %v620
    %v622 = vrot.slane %v617, %v621
    %v656 = vunpack.c.l.b16 %v585
    %v657 = vunpack.c.l.b16 %v586
    %v658 = vunpack.c.l.b16 %v587
    %v659 = vunpack.c.l.b16 %v588
    %v660 = vunpack.c.l.b16 %v589
    %v661 = vunpack.c.l.b16 %v590
    %v662 = vunpack.c.l.b16 %v591
    %v663 = vunpack.c.l.b16 %v592
    %v664 = vunpack.c.l.b16 %v593
    %v665 = vunpack.c.l.b16 %v594
    %v666 = vunpack.c.l.b16 %v595
    %v667 = vunpack.c.l.b16 %v596
    %v668 = vunpack.c.l.b16 %v597
    %v669 = vunpack.c.l.b16 %v598
    %v670 = vunpack.c.l.b16 %v599
    %v671 = vunpack.c.l.b16 %v600
    %v672 = vunpack.c.l.b16 %v601
    %v673 = vunpack.c.l.b16 %v602
    %v674 = vunpack.c.l.b16 %v603
    %v675 = vunpack.c.l.b16 %v604
    %v676 = vunpack.c.l.b16 %v605
    %v677 = vunpack.c.l.b16 %v606
    %v678 = vunpack.c.l.b16 %v607
    %v679 = vunpack.c.l.b16 %v608
    %v680 = vunpack.c.l.b16 %v609
    %v681 = vunpack.c.l.b16 %v610
    %v682 = vunpack.c.l.b16 %v611
    %v683 = vunpack.c.l.b16 %v612
    %v684 = vunpack.c.l.b16 %v613
    %v685 = vunpack.c.l.b16 %v614
    %v686 = vunpack.c.l.b16 %v615
    %v687 = vunpack.c.l.b16 %v616
    %v688 = vpack.c.b16 %v657, %v656
    %v689 = vpack.c.b16 %v659, %v658
    %v690 = vpack.c.b16 %v661, %v660
    %v691 = vpack.c.b16 %v663, %v662
    %v692 = vpack.c.b16 %v665, %v664
    %v693 = vpack.c.b16 %v667, %v666
    %v694 = vpack.c.b16 %v669, %v668
    %v695 = vpack.c.b16 %v671, %v670
    %v696 = vpack.c.b16 %v673, %v672
    %v697 = vpack.c.b16 %v675, %v674
    %v698 = vpack.c.b16 %v677, %v676
    %v699 = vpack.c.b16 %v679, %v678
    %v700 = vpack.c.b16 %v681, %v680
    %v701 = vpack.c.b16 %v683, %v682
    %v702 = vpack.c.b16 %v685, %v684
    %v703 = vpack.c.b16 %v687, %v686
    %720 = vmatprep.subr.bf16.mxu0 0
    %721 = vmatpush1.bf16.msra.mxu0 %v695
    %722 = vmatprep.subr.bf16.mxu0 0
    %723 = vmatpush1.bf16.msra.mxu0 %v694
    %724 = vmatprep.subr.bf16.mxu0 0
    %725 = vmatpush1.bf16.msra.mxu0 %v693
    %726 = vmatprep.subr.bf16.mxu0 0
    %727 = vmatpush1.bf16.msra.mxu0 %v692
    %728 = vmatprep.subr.bf16.mxu0 0
    %729 = vmatpush1.bf16.msra.mxu0 %v691
    %730 = vmatprep.subr.bf16.mxu0 0
    %731 = vmatpush1.bf16.msra.mxu0 %v690
    %732 = vmatprep.subr.bf16.mxu0 0
    %733 = vmatpush1.bf16.msra.mxu0 %v689
    %734 = vmatprep.subr.bf16.mxu0 0
    %735 = vmatpush1.bf16.msra.mxu0 %v688
    %736 = vmatprep.subr.bf16.mxu0 0
    %737 = vmatpush2.bf16.msra.mxu0 %v703
    %738 = vmatprep.subr.bf16.mxu0 0
    %739 = vmatpush2.bf16.msra.mxu0 %v702
    %740 = vmatprep.subr.bf16.mxu0 0
    %741 = vmatpush2.bf16.msra.mxu0 %v701
    %742 = vmatprep.subr.bf16.mxu0 0
    %743 = vmatpush2.bf16.msra.mxu0 %v700
    %744 = vmatprep.subr.bf16.mxu0 0
    %745 = vmatpush2.bf16.msra.mxu0 %v699
    %746 = vmatprep.subr.bf16.mxu0 0
    %747 = vmatpush2.bf16.msra.mxu0 %v698
    %748 = vmatprep.subr.bf16.mxu0 0
    %749 = vmatpush2.bf16.msra.mxu0 %v697
    %750 = vmatprep.subr.bf16.mxu0 0
    %751 = vmatpush2.bf16.msra.mxu0 %v696
    %752 = vmatprep.mubr.bf16.mxu0 %v584
    %753 = vmatmul.mubr.bf16.gmra.mxu0 %v583
    %v754 = vpop.f32.mrf.mxu0
    %v755 = vadd.f32 %v622, %v754
    %v756 = vpop.f32.mrf.mxu0
    %v757 = vpop.f32.mrf.mxu0
    %v758 = vpop.f32.mrf.mxu0
    %759 = vdwg.mxu0
    %v760 = vadd.f32 %v430, %v755
    %v761 = vpack.c.bf16 %v760, %v760
    %s762 = scalar_lea.vmem [#allocation5], 128
    %v763 = vld [vmem:[%s762] sm:$0xff]
    %v764 = vld [vmem:[%s762 + $0x8] sm:$0xff]
    %v765 = vld [vmem:[%s762 + $0x10] sm:$0xff]
    %v766 = vld [vmem:[%s762 + $0x18] sm:$0xff]
    %v767 = vld [vmem:[%s762 + $0x20] sm:$0xff]
    %v768 = vld [vmem:[%s762 + $0x28] sm:$0xff]
    %v769 = vld [vmem:[%s762 + $0x30] sm:$0xff]
    %v770 = vld [vmem:[%s762 + $0x38] sm:$0xff]
    %v771 = vld [vmem:[%s762 + $0x40] sm:$0xff]
    %v772 = vld [vmem:[%s762 + $0x48] sm:$0xff]
    %v773 = vld [vmem:[%s762 + $0x50] sm:$0xff]
    %v774 = vld [vmem:[%s762 + $0x58] sm:$0xff]
    %v775 = vld [vmem:[%s762 + $0x60] sm:$0xff]
    %v776 = vld [vmem:[%s762 + $0x68] sm:$0xff]
    %v777 = vld [vmem:[%s762 + $0x70] sm:$0xff]
    %v778 = vld [vmem:[%s762 + $0x78] sm:$0xff]
    %s779 = scalar_lea.vmem %s5, 2
    %v780 = vld [vmem:[%s779] sm:$0x3]
    %v782 = vlaneseq
    %v783 = vshrl.u32 %v782, 7
    %v784 = vsub.s32 0, %v783
    %v785 = vrot.slane %v780, %v784
    %v786 = vlaneseq
    %v787 = vshrl.u32 %v786, 7
    %v788 = vsub.s32 1, %v787
    %v789 = vrot.slane %v780, %v788
    %v808 = vunpack.c.l.b16 %v763
    %v809 = vunpack.c.h.b16 %v763
    %v810 = vunpack.c.l.b16 %v764
    %v811 = vunpack.c.h.b16 %v764
    %v812 = vunpack.c.l.b16 %v765
    %v813 = vunpack.c.h.b16 %v765
    %v814 = vunpack.c.l.b16 %v766
    %v815 = vunpack.c.h.b16 %v766
    %v816 = vunpack.c.l.b16 %v767
    %v817 = vunpack.c.h.b16 %v767
    %v818 = vunpack.c.l.b16 %v768
    %v819 = vunpack.c.h.b16 %v768
    %v820 = vunpack.c.l.b16 %v769
    %v821 = vunpack.c.h.b16 %v769
    %v822 = vunpack.c.l.b16 %v770
    %v823 = vunpack.c.h.b16 %v770
    %v824 = vunpack.c.l.b16 %v771
    %v825 = vunpack.c.h.b16 %v771
    %v826 = vunpack.c.l.b16 %v772
    %v827 = vunpack.c.h.b16 %v772
    %v828 = vunpack.c.l.b16 %v773
    %v829 = vunpack.c.h.b16 %v773
    %v830 = vunpack.c.l.b16 %v774
    %v831 = vunpack.c.h.b16 %v774
    %v832 = vunpack.c.l.b16 %v775
    %v833 = vunpack.c.h.b16 %v775
    %v834 = vunpack.c.l.b16 %v776
    %v835 = vunpack.c.h.b16 %v776
    %v836 = vunpack.c.l.b16 %v777
    %v837 = vunpack.c.h.b16 %v777
    %v838 = vunpack.c.l.b16 %v778
    %v839 = vunpack.c.h.b16 %v778
    %v840 = vpack.c.b16 %v810, %v808
    %v841 = vpack.c.b16 %v811, %v809
    %v842 = vpack.c.b16 %v814, %v812
    %v843 = vpack.c.b16 %v815, %v813
    %v844 = vpack.c.b16 %v818, %v816
    %v845 = vpack.c.b16 %v819, %v817
    %v846 = vpack.c.b16 %v822, %v820
    %v847 = vpack.c.b16 %v823, %v821
    %v848 = vpack.c.b16 %v826, %v824
    %v849 = vpack.c.b16 %v827, %v825
    %v850 = vpack.c.b16 %v830, %v828
    %v851 = vpack.c.b16 %v831, %v829
    %v852 = vpack.c.b16 %v834, %v832
    %v853 = vpack.c.b16 %v835, %v833
    %v854 = vpack.c.b16 %v838, %v836
    %v855 = vpack.c.b16 %v839, %v837
    %872 = vmatprep.subr.bf16.mxu0 %v855
    %873 = vmatpush1.bf16.msra.mxu0 %v854
    %874 = vmatprep.subr.bf16.mxu0 %v853
    %875 = vmatpush1.bf16.msra.mxu0 %v852
    %876 = vmatprep.subr.bf16.mxu0 %v851
    %877 = vmatpush1.bf16.msra.mxu0 %v850
    %878 = vmatprep.subr.bf16.mxu0 %v849
    %879 = vmatpush1.bf16.msra.mxu0 %v848
    %880 = vmatprep.subr.bf16.mxu0 %v847
    %881 = vmatpush1.bf16.msra.mxu0 %v846
    %882 = vmatprep.subr.bf16.mxu0 %v845
    %883 = vmatpush1.bf16.msra.mxu0 %v844
    %884 = vmatprep.subr.bf16.mxu0 %v843
    %885 = vmatpush1.bf16.msra.mxu0 %v842
    %886 = vmatprep.subr.bf16.mxu0 %v841
    %887 = vmatpush1.bf16.msra.mxu0 %v840
    %888 = vmatprep.subr.bf16.mxu0 0
    %889 = vmatpush2.bf16.msra.mxu0 0
    %890 = vmatprep.subr.bf16.mxu0 0
    %891 = vmatpush2.bf16.msra.mxu0 0
    %892 = vmatprep.subr.bf16.mxu0 0
    %893 = vmatpush2.bf16.msra.mxu0 0
    %894 = vmatprep.subr.bf16.mxu0 0
    %895 = vmatpush2.bf16.msra.mxu0 0
    %896 = vmatprep.subr.bf16.mxu0 0
    %897 = vmatpush2.bf16.msra.mxu0 0
    %898 = vmatprep.subr.bf16.mxu0 0
    %899 = vmatpush2.bf16.msra.mxu0 0
    %900 = vmatprep.subr.bf16.mxu0 0
    %901 = vmatpush2.bf16.msra.mxu0 0
    %902 = vmatprep.subr.bf16.mxu0 0
    %903 = vmatpush2.bf16.msra.mxu0 0
    %904 = vmatprep.mubr.bf16.mxu0 0
    %905 = vmatmul.mubr.bf16.gmra.mxu0 %v761
    %v906 = vpop.f32.mrf.mxu0
    %v907 = vadd.f32 %v785, %v906
    %v908 = vpop.f32.mrf.mxu0
    %v909 = vadd.f32 %v789, %v908
    %v910 = vpop.f32.mrf.mxu0
    %v911 = vpop.f32.mrf.mxu0
    %912 = vdwg.mxu0
    %v913 = vmax.f32 %v907, 0.0
    %v914 = vmax.f32 %v909, 0.0
    %v915 = vpack.c.bf16 %v913, %v913
    %v916 = vpack.c.bf16 %v914, %v914
    %s917 = scalar_lea.vmem [#allocation7], 128
    %v918 = vld [vmem:[%s917] sm:$0xf]
    %v919 = vld [vmem:[%s917 + $0x4] sm:$0xf]
    %v920 = vld [vmem:[%s917 + $0x8] sm:$0xf]
    %v921 = vld [vmem:[%s917 + $0xc] sm:$0xf]
    %v922 = vld [vmem:[%s917 + $0x10] sm:$0xf]
    %v923 = vld [vmem:[%s917 + $0x14] sm:$0xf]
    %v924 = vld [vmem:[%s917 + $0x18] sm:$0xf]
    %v925 = vld [vmem:[%s917 + $0x1c] sm:$0xf]
    %v926 = vld [vmem:[%s917 + $0x20] sm:$0xf]
    %v927 = vld [vmem:[%s917 + $0x24] sm:$0xf]
    %v928 = vld [vmem:[%s917 + $0x28] sm:$0xf]
    %v929 = vld [vmem:[%s917 + $0x2c] sm:$0xf]
    %v930 = vld [vmem:[%s917 + $0x30] sm:$0xf]
    %v931 = vld [vmem:[%s917 + $0x34] sm:$0xf]
    %v932 = vld [vmem:[%s917 + $0x38] sm:$0xf]
    %v933 = vld [vmem:[%s917 + $0x3c] sm:$0xf]
    %v934 = vld [vmem:[%s917 + $0x40] sm:$0xf]
    %v935 = vld [vmem:[%s917 + $0x44] sm:$0xf]
    %v936 = vld [vmem:[%s917 + $0x48] sm:$0xf]
    %v937 = vld [vmem:[%s917 + $0x4c] sm:$0xf]
    %v938 = vld [vmem:[%s917 + $0x50] sm:$0xf]
    %v939 = vld [vmem:[%s917 + $0x54] sm:$0xf]
    %v940 = vld [vmem:[%s917 + $0x58] sm:$0xf]
    %v941 = vld [vmem:[%s917 + $0x5c] sm:$0xf]
    %v942 = vld [vmem:[%s917 + $0x60] sm:$0xf]
    %v943 = vld [vmem:[%s917 + $0x64] sm:$0xf]
    %v944 = vld [vmem:[%s917 + $0x68] sm:$0xf]
    %v945 = vld [vmem:[%s917 + $0x6c] sm:$0xf]
    %v946 = vld [vmem:[%s917 + $0x70] sm:$0xf]
    %v947 = vld [vmem:[%s917 + $0x74] sm:$0xf]
    %v948 = vld [vmem:[%s917 + $0x78] sm:$0xf]
    %v949 = vld [vmem:[%s917 + $0x7c] sm:$0xf]
    %s950 = scalar_lea.vmem %s7, 1
    %v951 = vld [vmem:[%s950] sm:$0x1]
    %v953 = vlaneseq
    %v954 = vshrl.u32 %v953, 7
    %v955 = vsub.s32 0, %v954
    %v956 = vrot.slane %v951, %v955
    %v990 = vunpack.c.l.b16 %v918
    %v991 = vunpack.c.l.b16 %v919
    %v992 = vunpack.c.l.b16 %v920
    %v993 = vunpack.c.l.b16 %v921
    %v994 = vunpack.c.l.b16 %v922
    %v995 = vunpack.c.l.b16 %v923
    %v996 = vunpack.c.l.b16 %v924
    %v997 = vunpack.c.l.b16 %v925
    %v998 = vunpack.c.l.b16 %v926
    %v999 = vunpack.c.l.b16 %v927
    %v1000 = vunpack.c.l.b16 %v928
    %v1001 = vunpack.c.l.b16 %v929
    %v1002 = vunpack.c.l.b16 %v930
    %v1003 = vunpack.c.l.b16 %v931
    %v1004 = vunpack.c.l.b16 %v932
    %v1005 = vunpack.c.l.b16 %v933
    %v1006 = vunpack.c.l.b16 %v934
    %v1007 = vunpack.c.l.b16 %v935
    %v1008 = vunpack.c.l.b16 %v936
    %v1009 = vunpack.c.l.b16 %v937
    %v1010 = vunpack.c.l.b16 %v938
    %v1011 = vunpack.c.l.b16 %v939
    %v1012 = vunpack.c.l.b16 %v940
    %v1013 = vunpack.c.l.b16 %v941
    %v1014 = vunpack.c.l.b16 %v942
    %v1015 = vunpack.c.l.b16 %v943
    %v1016 = vunpack.c.l.b16 %v944
    %v1017 = vunpack.c.l.b16 %v945
    %v1018 = vunpack.c.l.b16 %v946
    %v1019 = vunpack.c.l.b16 %v947
    %v1020 = vunpack.c.l.b16 %v948
    %v1021 = vunpack.c.l.b16 %v949
    %v1022 = vpack.c.b16 %v991, %v990
    %v1023 = vpack.c.b16 %v993, %v992
    %v1024 = vpack.c.b16 %v995, %v994
    %v1025 = vpack.c.b16 %v997, %v996
    %v1026 = vpack.c.b16 %v999, %v998
    %v1027 = vpack.c.b16 %v1001, %v1000
    %v1028 = vpack.c.b16 %v1003, %v1002
    %v1029 = vpack.c.b16 %v1005, %v1004
    %v1030 = vpack.c.b16 %v1007, %v1006
    %v1031 = vpack.c.b16 %v1009, %v1008
    %v1032 = vpack.c.b16 %v1011, %v1010
    %v1033 = vpack.c.b16 %v1013, %v1012
    %v1034 = vpack.c.b16 %v1015, %v1014
    %v1035 = vpack.c.b16 %v1017, %v1016
    %v1036 = vpack.c.b16 %v1019, %v1018
    %v1037 = vpack.c.b16 %v1021, %v1020
    %1054 = vmatprep.subr.bf16.mxu0 0
    %1055 = vmatpush1.bf16.msra.mxu0 %v1029
    %1056 = vmatprep.subr.bf16.mxu0 0
    %1057 = vmatpush1.bf16.msra.mxu0 %v1028
    %1058 = vmatprep.subr.bf16.mxu0 0
    %1059 = vmatpush1.bf16.msra.mxu0 %v1027
    %1060 = vmatprep.subr.bf16.mxu0 0
    %1061 = vmatpush1.bf16.msra.mxu0 %v1026
    %1062 = vmatprep.subr.bf16.mxu0 0
    %1063 = vmatpush1.bf16.msra.mxu0 %v1025
    %1064 = vmatprep.subr.bf16.mxu0 0
    %1065 = vmatpush1.bf16.msra.mxu0 %v1024
    %1066 = vmatprep.subr.bf16.mxu0 0
    %1067 = vmatpush1.bf16.msra.mxu0 %v1023
    %1068 = vmatprep.subr.bf16.mxu0 0
    %1069 = vmatpush1.bf16.msra.mxu0 %v1022
    %1070 = vmatprep.subr.bf16.mxu0 0
    %1071 = vmatpush2.bf16.msra.mxu0 %v1037
    %1072 = vmatprep.subr.bf16.mxu0 0
    %1073 = vmatpush2.bf16.msra.mxu0 %v1036
    %1074 = vmatprep.subr.bf16.mxu0 0
    %1075 = vmatpush2.bf16.msra.mxu0 %v1035
    %1076 = vmatprep.subr.bf16.mxu0 0
    %1077 = vmatpush2.bf16.msra.mxu0 %v1034
    %1078 = vmatprep.subr.bf16.mxu0 0
    %1079 = vmatpush2.bf16.msra.mxu0 %v1033
    %1080 = vmatprep.subr.bf16.mxu0 0
    %1081 = vmatpush2.bf16.msra.mxu0 %v1032
    %1082 = vmatprep.subr.bf16.mxu0 0
    %1083 = vmatpush2.bf16.msra.mxu0 %v1031
    %1084 = vmatprep.subr.bf16.mxu0 0
    %1085 = vmatpush2.bf16.msra.mxu0 %v1030
    %1086 = vmatprep.mubr.bf16.mxu0 %v916
    %1087 = vmatmul.mubr.bf16.gmra.mxu0 %v915
    %v1088 = vpop.f32.mrf.mxu0
    %v1089 = vadd.f32 %v956, %v1088
    %v1090 = vpop.f32.mrf.mxu0
    %v1091 = vpop.f32.mrf.mxu0
    %v1092 = vpop.f32.mrf.mxu0
    %1093 = vdwg.mxu0
    %v1094 = vadd.f32 %v760, %v1089
    %v1095 = vpack.c.bf16 %v1094, %v1094
    %s1096 = scalar_lea.vmem [#allocation5], 256
    %v1097 = vld [vmem:[%s1096] sm:$0xff]
    %v1098 = vld [vmem:[%s1096 + $0x8] sm:$0xff]
    %v1099 = vld [vmem:[%s1096 + $0x10] sm:$0xff]
    %v1100 = vld [vmem:[%s1096 + $0x18] sm:$0xff]
    %v1101 = vld [vmem:[%s1096 + $0x20] sm:$0xff]
    %v1102 = vld [vmem:[%s1096 + $0x28] sm:$0xff]
    %v1103 = vld [vmem:[%s1096 + $0x30] sm:$0xff]
    %v1104 = vld [vmem:[%s1096 + $0x38] sm:$0xff]
    %v1105 = vld [vmem:[%s1096 + $0x40] sm:$0xff]
    %v1106 = vld [vmem:[%s1096 + $0x48] sm:$0xff]
    %v1107 = vld [vmem:[%s1096 + $0x50] sm:$0xff]
    %v1108 = vld [vmem:[%s1096 + $0x58] sm:$0xff]
    %v1109 = vld [vmem:[%s1096 + $0x60] sm:$0xff]
    %v1110 = vld [vmem:[%s1096 + $0x68] sm:$0xff]
    %v1111 = vld [vmem:[%s1096 + $0x70] sm:$0xff]
    %v1112 = vld [vmem:[%s1096 + $0x78] sm:$0xff]
    %s1113 = scalar_lea.vmem %s5, 4
    %v1114 = vld [vmem:[%s1113] sm:$0x3]
    %v1116 = vlaneseq
    %v1117 = vshrl.u32 %v1116, 7
    %v1118 = vsub.s32 0, %v1117
    %v1119 = vrot.slane %v1114, %v1118
    %v1120 = vlaneseq
    %v1121 = vshrl.u32 %v1120, 7
    %v1122 = vsub.s32 1, %v1121
    %v1123 = vrot.slane %v1114, %v1122
    %v1142 = vunpack.c.l.b16 %v1097
    %v1143 = vunpack.c.h.b16 %v1097
    %v1144 = vunpack.c.l.b16 %v1098
    %v1145 = vunpack.c.h.b16 %v1098
    %v1146 = vunpack.c.l.b16 %v1099
    %v1147 = vunpack.c.h.b16 %v1099
    %v1148 = vunpack.c.l.b16 %v1100
    %v1149 = vunpack.c.h.b16 %v1100
    %v1150 = vunpack.c.l.b16 %v1101
    %v1151 = vunpack.c.h.b16 %v1101
    %v1152 = vunpack.c.l.b16 %v1102
    %v1153 = vunpack.c.h.b16 %v1102
    %v1154 = vunpack.c.l.b16 %v1103
    %v1155 = vunpack.c.h.b16 %v1103
    %v1156 = vunpack.c.l.b16 %v1104
    %v1157 = vunpack.c.h.b16 %v1104
    %v1158 = vunpack.c.l.b16 %v1105
    %v1159 = vunpack.c.h.b16 %v1105
    %v1160 = vunpack.c.l.b16 %v1106
    %v1161 = vunpack.c.h.b16 %v1106
    %v1162 = vunpack.c.l.b16 %v1107
    %v1163 = vunpack.c.h.b16 %v1107
    %v1164 = vunpack.c.l.b16 %v1108
    %v1165 = vunpack.c.h.b16 %v1108
    %v1166 = vunpack.c.l.b16 %v1109
    %v1167 = vunpack.c.h.b16 %v1109
    %v1168 = vunpack.c.l.b16 %v1110
    %v1169 = vunpack.c.h.b16 %v1110
    %v1170 = vunpack.c.l.b16 %v1111
    %v1171 = vunpack.c.h.b16 %v1111
    %v1172 = vunpack.c.l.b16 %v1112
    %v1173 = vunpack.c.h.b16 %v1112
    %v1174 = vpack.c.b16 %v1144, %v1142
    %v1175 = vpack.c.b16 %v1145, %v1143
    %v1176 = vpack.c.b16 %v1148, %v1146
    %v1177 = vpack.c.b16 %v1149, %v1147
    %v1178 = vpack.c.b16 %v1152, %v1150
    %v1179 = vpack.c.b16 %v1153, %v1151
    %v1180 = vpack.c.b16 %v1156, %v1154
    %v1181 = vpack.c.b16 %v1157, %v1155
    %v1182 = vpack.c.b16 %v1160, %v1158
    %v1183 = vpack.c.b16 %v1161, %v1159
    %v1184 = vpack.c.b16 %v1164, %v1162
    %v1185 = vpack.c.b16 %v1165, %v1163
    %v1186 = vpack.c.b16 %v1168, %v1166
    %v1187 = vpack.c.b16 %v1169, %v1167
    %v1188 = vpack.c.b16 %v1172, %v1170
    %v1189 = vpack.c.b16 %v1173, %v1171
    %1206 = vmatprep.subr.bf16.mxu0 %v1189
    %1207 = vmatpush1.bf16.msra.mxu0 %v1188
    %1208 = vmatprep.subr.bf16.mxu0 %v1187
    %1209 = vmatpush1.bf16.msra.mxu0 %v1186
    %1210 = vmatprep.subr.bf16.mxu0 %v1185
    %1211 = vmatpush1.bf16.msra.mxu0 %v1184
    %1212 = vmatprep.subr.bf16.mxu0 %v1183
    %1213 = vmatpush1.bf16.msra.mxu0 %v1182
    %1214 = vmatprep.subr.bf16.mxu0 %v1181
    %1215 = vmatpush1.bf16.msra.mxu0 %v1180
    %1216 = vmatprep.subr.bf16.mxu0 %v1179
    %1217 = vmatpush1.bf16.msra.mxu0 %v1178
    %1218 = vmatprep.subr.bf16.mxu0 %v1177
    %1219 = vmatpush1.bf16.msra.mxu0 %v1176
    %1220 = vmatprep.subr.bf16.mxu0 %v1175
    %1221 = vmatpush1.bf16.msra.mxu0 %v1174
    %1222 = vmatprep.subr.bf16.mxu0 0
    %1223 = vmatpush2.bf16.msra.mxu0 0
    %1224 = vmatprep.subr.bf16.mxu0 0
    %1225 = vmatpush2.bf16.msra.mxu0 0
    %1226 = vmatprep.subr.bf16.mxu0 0
    %1227 = vmatpush2.bf16.msra.mxu0 0
    %1228 = vmatprep.subr.bf16.mxu0 0
    %1229 = vmatpush2.bf16.msra.mxu0 0
    %1230 = vmatprep.subr.bf16.mxu0 0
    %1231 = vmatpush2.bf16.msra.mxu0 0
    %1232 = vmatprep.subr.bf16.mxu0 0
    %1233 = vmatpush2.bf16.msra.mxu0 0
    %1234 = vmatprep.subr.bf16.mxu0 0
    %1235 = vmatpush2.bf16.msra.mxu0 0
    %1236 = vmatprep.subr.bf16.mxu0 0
    %1237 = vmatpush2.bf16.msra.mxu0 0
    %1238 = vmatprep.mubr.bf16.mxu0 0
    %1239 = vmatmul.mubr.bf16.gmra.mxu0 %v1095
    %v1240 = vpop.f32.mrf.mxu0
    %v1241 = vadd.f32 %v1119, %v1240
    %v1242 = vpop.f32.mrf.mxu0
    %v1243 = vadd.f32 %v1123, %v1242
    %v1244 = vpop.f32.mrf.mxu0
    %v1245 = vpop.f32.mrf.mxu0
    %1246 = vdwg.mxu0
    %v1247 = vmax.f32 %v1241, 0.0
    %v1248 = vmax.f32 %v1243, 0.0
    %v1249 = vpack.c.bf16 %v1247, %v1247
    %v1250 = vpack.c.bf16 %v1248, %v1248
    %s1251 = scalar_lea.vmem [#allocation7], 256
    %v1252 = vld [vmem:[%s1251] sm:$0xf]
    %v1253 = vld [vmem:[%s1251 + $0x4] sm:$0xf]
    %v1254 = vld [vmem:[%s1251 + $0x8] sm:$0xf]
    %v1255 = vld [vmem:[%s1251 + $0xc] sm:$0xf]
    %v1256 = vld [vmem:[%s1251 + $0x10] sm:$0xf]
    %v1257 = vld [vmem:[%s1251 + $0x14] sm:$0xf]
    %v1258 = vld [vmem:[%s1251 + $0x18] sm:$0xf]
    %v1259 = vld [vmem:[%s1251 + $0x1c] sm:$0xf]
    %v1260 = vld [vmem:[%s1251 + $0x20] sm:$0xf]
    %v1261 = vld [vmem:[%s1251 + $0x24] sm:$0xf]
    %v1262 = vld [vmem:[%s1251 + $0x28] sm:$0xf]
    %v1263 = vld [vmem:[%s1251 + $0x2c] sm:$0xf]
    %v1264 = vld [vmem:[%s1251 + $0x30] sm:$0xf]
    %v1265 = vld [vmem:[%s1251 + $0x34] sm:$0xf]
    %v1266 = vld [vmem:[%s1251 + $0x38] sm:$0xf]
    %v1267 = vld [vmem:[%s1251 + $0x3c] sm:$0xf]
    %v1268 = vld [vmem:[%s1251 + $0x40] sm:$0xf]
    %v1269 = vld [vmem:[%s1251 + $0x44] sm:$0xf]
    %v1270 = vld [vmem:[%s1251 + $0x48] sm:$0xf]
    %v1271 = vld [vmem:[%s1251 + $0x4c] sm:$0xf]
    %v1272 = vld [vmem:[%s1251 + $0x50] sm:$0xf]
    %v1273 = vld [vmem:[%s1251 + $0x54] sm:$0xf]
    %v1274 = vld [vmem:[%s1251 + $0x58] sm:$0xf]
    %v1275 = vld [vmem:[%s1251 + $0x5c] sm:$0xf]
    %v1276 = vld [vmem:[%s1251 + $0x60] sm:$0xf]
    %v1277 = vld [vmem:[%s1251 + $0x64] sm:$0xf]
    %v1278 = vld [vmem:[%s1251 + $0x68] sm:$0xf]
    %v1279 = vld [vmem:[%s1251 + $0x6c] sm:$0xf]
    %v1280 = vld [vmem:[%s1251 + $0x70] sm:$0xf]
    %v1281 = vld [vmem:[%s1251 + $0x74] sm:$0xf]
    %v1282 = vld [vmem:[%s1251 + $0x78] sm:$0xf]
    %v1283 = vld [vmem:[%s1251 + $0x7c] sm:$0xf]
    %s1284 = scalar_lea.vmem %s7, 2
    %v1285 = vld [vmem:[%s1284] sm:$0x1]
    %v1287 = vlaneseq
    %v1288 = vshrl.u32 %v1287, 7
    %v1289 = vsub.s32 0, %v1288
    %v1290 = vrot.slane %v1285, %v1289
    %v1324 = vunpack.c.l.b16 %v1252
    %v1325 = vunpack.c.l.b16 %v1253
    %v1326 = vunpack.c.l.b16 %v1254
    %v1327 = vunpack.c.l.b16 %v1255
    %v1328 = vunpack.c.l.b16 %v1256
    %v1329 = vunpack.c.l.b16 %v1257
    %v1330 = vunpack.c.l.b16 %v1258
    %v1331 = vunpack.c.l.b16 %v1259
    %v1332 = vunpack.c.l.b16 %v1260
    %v1333 = vunpack.c.l.b16 %v1261
    %v1334 = vunpack.c.l.b16 %v1262
    %v1335 = vunpack.c.l.b16 %v1263
    %v1336 = vunpack.c.l.b16 %v1264
    %v1337 = vunpack.c.l.b16 %v1265
    %v1338 = vunpack.c.l.b16 %v1266
    %v1339 = vunpack.c.l.b16 %v1267
    %v1340 = vunpack.c.l.b16 %v1268
    %v1341 = vunpack.c.l.b16 %v1269
    %v1342 = vunpack.c.l.b16 %v1270
    %v1343 = vunpack.c.l.b16 %v1271
    %v1344 = vunpack.c.l.b16 %v1272
    %v1345 = vunpack.c.l.b16 %v1273
    %v1346 = vunpack.c.l.b16 %v1274
    %v1347 = vunpack.c.l.b16 %v1275
    %v1348 = vunpack.c.l.b16 %v1276
    %v1349 = vunpack.c.l.b16 %v1277
    %v1350 = vunpack.c.l.b16 %v1278
    %v1351 = vunpack.c.l.b16 %v1279
    %v1352 = vunpack.c.l.b16 %v1280
    %v1353 = vunpack.c.l.b16 %v1281
    %v1354 = vunpack.c.l.b16 %v1282
    %v1355 = vunpack.c.l.b16 %v1283
    %v1356 = vpack.c.b16 %v1325, %v1324
    %v1357 = vpack.c.b16 %v1327, %v1326
    %v1358 = vpack.c.b16 %v1329, %v1328
    %v1359 = vpack.c.b16 %v1331, %v1330
    %v1360 = vpack.c.b16 %v1333, %v1332
    %v1361 = vpack.c.b16 %v1335, %v1334
    %v1362 = vpack.c.b16 %v1337, %v1336
    %v1363 = vpack.c.b16 %v1339, %v1338
    %v1364 = vpack.c.b16 %v1341, %v1340
    %v1365 = vpack.c.b16 %v1343, %v1342
    %v1366 = vpack.c.b16 %v1345, %v1344
    %v1367 = vpack.c.b16 %v1347, %v1346
    %v1368 = vpack.c.b16 %v1349, %v1348
    %v1369 = vpack.c.b16 %v1351, %v1350
    %v1370 = vpack.c.b16 %v1353, %v1352
    %v1371 = vpack.c.b16 %v1355, %v1354
    %1388 = vmatprep.subr.bf16.mxu0 0
    %1389 = vmatpush1.bf16.msra.mxu0 %v1363
    %1390 = vmatprep.subr.bf16.mxu0 0
    %1391 = vmatpush1.bf16.msra.mxu0 %v1362
    %1392 = vmatprep.subr.bf16.mxu0 0
    %1393 = vmatpush1.bf16.msra.mxu0 %v1361
    %1394 = vmatprep.subr.bf16.mxu0 0
    %1395 = vmatpush1.bf16.msra.mxu0 %v1360
    %1396 = vmatprep.subr.bf16.mxu0 0
    %1397 = vmatpush1.bf16.msra.mxu0 %v1359
    %1398 = vmatprep.subr.bf16.mxu0 0
    %1399 = vmatpush1.bf16.msra.mxu0 %v1358
    %1400 = vmatprep.subr.bf16.mxu0 0
    %1401 = vmatpush1.bf16.msra.mxu0 %v1357
    %1402 = vmatprep.subr.bf16.mxu0 0
    %1403 = vmatpush1.bf16.msra.mxu0 %v1356
    %1404 = vmatprep.subr.bf16.mxu0 0
    %1405 = vmatpush2.bf16.msra.mxu0 %v1371
    %1406 = vmatprep.subr.bf16.mxu0 0
    %1407 = vmatpush2.bf16.msra.mxu0 %v1370
    %1408 = vmatprep.subr.bf16.mxu0 0
    %1409 = vmatpush2.bf16.msra.mxu0 %v1369
    %1410 = vmatprep.subr.bf16.mxu0 0
    %1411 = vmatpush2.bf16.msra.mxu0 %v1368
    %1412 = vmatprep.subr.bf16.mxu0 0
    %1413 = vmatpush2.bf16.msra.mxu0 %v1367
    %1414 = vmatprep.subr.bf16.mxu0 0
    %1415 = vmatpush2.bf16.msra.mxu0 %v1366
    %1416 = vmatprep.subr.bf16.mxu0 0
    %1417 = vmatpush2.bf16.msra.mxu0 %v1365
    %1418 = vmatprep.subr.bf16.mxu0 0
    %1419 = vmatpush2.bf16.msra.mxu0 %v1364
    %1420 = vmatprep.mubr.bf16.mxu0 %v1250
    %1421 = vmatmul.mubr.bf16.gmra.mxu0 %v1249
    %v1422 = vpop.f32.mrf.mxu0
    %v1423 = vadd.f32 %v1290, %v1422
    %v1424 = vpop.f32.mrf.mxu0
    %v1425 = vpop.f32.mrf.mxu0
    %v1426 = vpop.f32.mrf.mxu0
    %1427 = vdwg.mxu0
    %v1428 = vadd.f32 %v1094, %v1423
    %v1429 = vpack.c.bf16 %v1428, %v1428
    %v1430 = vld [vmem:[#allocation8] sm:$0xf]
    %v1431 = vld [vmem:[#allocation8 + $0x4] sm:$0xf]
    %v1432 = vld [vmem:[#allocation8 + $0x8] sm:$0xf]
    %v1433 = vld [vmem:[#allocation8 + $0xc] sm:$0xf]
    %v1434 = vld [vmem:[#allocation8 + $0x10] sm:$0xf]
    %v1435 = vld [vmem:[#allocation8 + $0x14] sm:$0xf]
    %v1436 = vld [vmem:[#allocation8 + $0x18] sm:$0xf]
    %v1437 = vld [vmem:[#allocation8 + $0x1c] sm:$0xf]
    %v1438 = vld [vmem:[#allocation8 + $0x20] sm:$0xf]
    %v1439 = vld [vmem:[#allocation8 + $0x24] sm:$0xf]
    %v1440 = vld [vmem:[#allocation8 + $0x28] sm:$0xf]
    %v1441 = vld [vmem:[#allocation8 + $0x2c] sm:$0xf]
    %v1442 = vld [vmem:[#allocation8 + $0x30] sm:$0xf]
    %v1443 = vld [vmem:[#allocation8 + $0x34] sm:$0xf]
    %v1444 = vld [vmem:[#allocation8 + $0x38] sm:$0xf]
    %v1445 = vld [vmem:[#allocation8 + $0x3c] sm:$0xf]
    %v1446 = vld [vmem:[%s9] sm:$0x1]
    %v1448 = vlaneseq
    %v1449 = vshrl.u32 %v1448, 7
    %v1450 = vsub.s32 0, %v1449
    %v1451 = vrot.slane %v1446, %v1450
    %v1469 = vunpack.c.l.b16 %v1430
    %v1470 = vunpack.c.l.b16 %v1431
    %v1471 = vunpack.c.l.b16 %v1432
    %v1472 = vunpack.c.l.b16 %v1433
    %v1473 = vunpack.c.l.b16 %v1434
    %v1474 = vunpack.c.l.b16 %v1435
    %v1475 = vunpack.c.l.b16 %v1436
    %v1476 = vunpack.c.l.b16 %v1437
    %v1477 = vunpack.c.l.b16 %v1438
    %v1478 = vunpack.c.l.b16 %v1439
    %v1479 = vunpack.c.l.b16 %v1440
    %v1480 = vunpack.c.l.b16 %v1441
    %v1481 = vunpack.c.l.b16 %v1442
    %v1482 = vunpack.c.l.b16 %v1443
    %v1483 = vunpack.c.l.b16 %v1444
    %v1484 = vunpack.c.l.b16 %v1445
    %v1485 = vpack.c.b16 %v1470, %v1469
    %v1486 = vpack.c.b16 %v1472, %v1471
    %v1487 = vpack.c.b16 %v1474, %v1473
    %v1488 = vpack.c.b16 %v1476, %v1475
    %v1489 = vpack.c.b16 %v1478, %v1477
    %v1490 = vpack.c.b16 %v1480, %v1479
    %v1491 = vpack.c.b16 %v1482, %v1481
    %v1492 = vpack.c.b16 %v1484, %v1483
    %1501 = vmatprep.subr.bf16.mxu0 0
    %1502 = vmatpush1.bf16.msra.mxu0 %v1492
    %1503 = vmatprep.subr.bf16.mxu0 0
    %1504 = vmatpush1.bf16.msra.mxu0 %v1491
    %1505 = vmatprep.subr.bf16.mxu0 0
    %1506 = vmatpush1.bf16.msra.mxu0 %v1490
    %1507 = vmatprep.subr.bf16.mxu0 0
    %1508 = vmatpush1.bf16.msra.mxu0 %v1489
    %1509 = vmatprep.subr.bf16.mxu0 0
    %1510 = vmatpush1.bf16.msra.mxu0 %v1488
    %1511 = vmatprep.subr.bf16.mxu0 0
    %1512 = vmatpush1.bf16.msra.mxu0 %v1487
    %1513 = vmatprep.subr.bf16.mxu0 0
    %1514 = vmatpush1.bf16.msra.mxu0 %v1486
    %1515 = vmatprep.subr.bf16.mxu0 0
    %1516 = vmatpush1.bf16.msra.mxu0 %v1485
    %1517 = vmatprep.subr.bf16.mxu0 0
    %1518 = vmatpush2.bf16.msra.mxu0 0
    %1519 = vmatprep.subr.bf16.mxu0 0
    %1520 = vmatpush2.bf16.msra.mxu0 0
    %1521 = vmatprep.subr.bf16.mxu0 0
    %1522 = vmatpush2.bf16.msra.mxu0 0
    %1523 = vmatprep.subr.bf16.mxu0 0
    %1524 = vmatpush2.bf16.msra.mxu0 0
    %1525 = vmatprep.subr.bf16.mxu0 0
    %1526 = vmatpush2.bf16.msra.mxu0 0
    %1527 = vmatprep.subr.bf16.mxu0 0
    %1528 = vmatpush2.bf16.msra.mxu0 0
    %1529 = vmatprep.subr.bf16.mxu0 0
    %1530 = vmatpush2.bf16.msra.mxu0 0
    %1531 = vmatprep.subr.bf16.mxu0 0
    %1532 = vmatpush2.bf16.msra.mxu0 0
    %1533 = vmatprep.mubr.bf16.mxu0 0
    %1534 = vmatmul.mubr.bf16.gmra.mxu0 %v1429
    %v1535 = vpop.f32.mrf.mxu0
    %v1536 = vadd.f32 %v1451, %v1535
    %v1537 = vpop.f32.mrf.mxu0
    %v1538 = vpop.f32.mrf.mxu0
    %v1539 = vpop.f32.mrf.mxu0
    %1540 = vdwg.mxu0
    %1541 = vst [vmem:[#allocation10] sm:$0xff] %v1536
    // Predicated region
    $region58: #{mlp_backbone_forward.1} parent=1 // pred_check
      _
    $region59: #{mlp_backbone_forward.1} parent=1 // pred_check_branch
      %1543 = sbr.rel (0) target = $region61
    $region60: #{mlp_backbone_forward.1} parent=1 // pred_region
      %s1545 = ssub.s32 128, 128
      %1546 = vsyncadd [#allocation4], %s1545
      %s1548 = sshll.u32 [#allocation10], 4
      %s1549 = int_to_ptr.vmem [resolvable:$true] %s1548
      %1551 = dma.vmem_to_hbm [thread:$0]  %s1549, 128, %s10, [#allocation4]
    $region61: #{mlp_backbone_forward.1} parent=1 // pred_fallthru
      _
    // Predicated region
    $region62: #{mlp_backbone_forward.1} parent=1 // pred_check
      _
    $region63: #{mlp_backbone_forward.1} parent=1 // pred_check_branch
      %1553 = sbr.rel (0) target = $region65
    $region64: #{mlp_backbone_forward.1} parent=1 // pred_region
      %1554 = dma.done [#allocation4], 128
    $region65: #{mlp_backbone_forward.1} parent=1 // pred_fallthru
      _
    %1555 = vsyncpa [#allocation3], 1
    %1556 = vsyncpa [#allocation6], 1
    %1557 = vsyncpa [#allocation9], 1
    %1558 = vsyncpa [#allocation4], 1

</llo_original>
